<compile_context>
chip_gen: v7x
topology: tpu7x:2x2x1
jax: 0.10.0
libtpu: 0.0.40
codegen_flags: <defaults>
</compile_context>

<pallas_src>
import jax
import jax.numpy as jnp
from jax.experimental import pallas as pl
from jax.experimental.pallas import tpu as pltpu

N_OPS = 10                       # matches ComplexTorchModule(n_ops=10)
LANE = 128                       # TPU lane width
# Per-array block budget (f32): 4 MiB.  3 arrays (2 in + 1 out) x 2 double
# buffers x 4 MiB = 24 MiB of pipelined buffers; vmem_limit_bytes is raised
# explicitly to 48 MiB, which leaves headroom on every generation
# (v5e/v6e: 128 MiB physical; v7x: 64 MiB physical per TC).
_BLOCK_BYTES = 4 * 1024 * 1024
_VMEM_LIMIT_BYTES = 48 * 1024 * 1024
_MIN_PALLAS_ELEMS = 1 << 18      # below ~1 MiB f32 the fused XLA path is faster


def _round_up(n, m):
    return ((n + m - 1) // m) * m


def _complex_kernel(x_ref, y_ref, o_ref):
    """Elementwise: (x*y*sin(x) + exp(y)*cos(x)) * N_OPS.

    NOTE: the ragged last block feeds out-of-bounds garbage into exp/sin/cos;
    TPU has no FP traps and the OOB lanes are masked on store, so any inf/NaN
    produced there never reaches HBM.
    """
    x = x_ref[...]
    y = y_ref[...]
    o_ref[...] = (x * y * jnp.sin(x) + jnp.exp(y) * jnp.cos(x)) * jnp.float32(N_OPS)


def _elementwise_ref(x, y):
    """Pure-JAX reference (identical ordering to the PyTorch forward)."""
    result = jnp.zeros_like(x)
    for _ in range(N_OPS):
        result = result + x * y * jnp.sin(x) + jnp.exp(y) * jnp.cos(x)
    return result


def complex_torch_module_forward(x, y, *, min_pallas_elems=_MIN_PALLAS_ELEMS):
    """JAX/Pallas equivalent of ComplexTorchModule.forward (n_ops=10).

    x, y: float32 arrays of identical shape (e.g. NCHW).  Returns same
    shape/dtype.
    """
    assert x.shape == y.shape, "x and y must have the same shape"
    assert x.dtype == jnp.float32 and y.dtype == jnp.float32, \
        "kernel tiling math assumes float32 inputs"
    orig_shape = x.shape
    total = int(x.size)

    # Tiny inputs: pallas_call fixed overhead dwarfs the work; let XLA fuse.
    if total < min_pallas_elems:
        return _elementwise_ref(x, y)

    xf = jnp.ravel(x)
    yf = jnp.ravel(y)

    # Largest 128-divisible prefix goes through Pallas; the (<128 element)
    # tail, if any, is handled by the XLA path -- no full-array pad copies.
    main = (total // LANE) * LANE
    tail = total - main
    if main == 0:
        return _elementwise_ref(x, y)

    # Widest lane-dense layout that divides the prefix (128 is already fine
    # for unmasked stores; wider is a minor bonus, never worth a pad/copy).
    lane_w = LANE
    for cand in (1024, 512, 256, 128):
        if main % cand == 0:
            lane_w = cand
            break

    rows = main // lane_w
    x2d = xf[:main].reshape(rows, lane_w)
    y2d = yf[:main].reshape(rows, lane_w)

    # Multi-MiB row tiles; a ragged last block is handled by Pallas
    # (out-of-bounds reads are garbage, out-of-bounds writes are masked).
    tile_rows = max(8, _BLOCK_BYTES // (lane_w * 4))
    tile_rows = min(tile_rows, _round_up(rows, 8))

    grid = (pl.cdiv(rows, tile_rows),)
    spec = pl.BlockSpec((tile_rows, lane_w), lambda i: (i, 0))

    out2d = pl.pallas_call(
        _complex_kernel,
        out_shape=jax.ShapeDtypeStruct((rows, lane_w), x.dtype),
        grid=grid,
        in_specs=[spec, spec],
        out_specs=spec,
        compiler_params=pltpu.CompilerParams(
            dimension_semantics=("parallel",),
            vmem_limit_bytes=_VMEM_LIMIT_BYTES),
        # TODO(synk): on v7x, verify in a trace that the "parallel" grid axis
        # is actually sharded across both TensorCores; if not, switch to
        # pltpu.CORE_PARALLEL / pl.core_map for the ~2x HBM-streaming win.
    )(x2d, y2d)

    out_flat = out2d.reshape(-1)
    if tail:
        tail_out = _elementwise_ref(xf[main:], yf[main:])
        out_flat = jnp.concatenate([out_flat, tail_out])
    return out_flat.reshape(orig_shape)


if __name__ == "__main__":
    key = jax.random.PRNGKey(0)
    kx, ky = jax.random.split(key)
    # NCHW, small shapes: batch=2, channels=4, spatial=16x16
    x = jax.random.normal(kx, (2, 4, 16, 16), dtype=jnp.float32)
    y = jax.random.normal(ky, (2, 4, 16, 16), dtype=jnp.float32)

    # Force the Pallas path even for this small test input.
    out = complex_torch_module_forward(x, y, min_pallas_elems=0)
    out = jax.block_until_ready(out)
    ref = _elementwise_ref(x, y)
    assert out.shape == x.shape and out.dtype == x.dtype
    assert jnp.allclose(out, ref, rtol=1e-5, atol=1e-5), "mismatch vs reference"

    # Exercise narrower lane-width selection and the prefix+tail path
    # (flat size not a multiple of 128).
    for shape in ((2, 3, 16, 16), (3, 5, 7, 11)):
        k2 = jax.random.fold_in(key, shape[-1])
        kx2, ky2 = jax.random.split(k2)
        x2 = jax.random.normal(kx2, shape, dtype=jnp.float32)
        y2 = jax.random.normal(ky2, shape, dtype=jnp.float32)
        o2 = jax.block_until_ready(
            complex_torch_module_forward(x2, y2, min_pallas_elems=0))
        assert o2.shape == shape
        assert jnp.allclose(o2, _elementwise_ref(x2, y2), rtol=1e-5, atol=1e-5)

    print("KERNEL_OK")
</pallas_src>

<mosaic_0001>
module attributes {stable_mosaic.version = 11 : i64} {
  func.func @_complex_kernel(%arg0: i32, %arg1: memref<8x1024xf32, #tpu.memory_space<vmem>>, %arg2: memref<8x1024xf32, #tpu.memory_space<vmem>>, %arg3: memref<8x1024xf32, #tpu.memory_space<vmem>>) attributes {dimension_semantics = [#tpu.dimension_semantics<parallel>], iteration_bounds = array<i64: 1>, scalar_prefetch = 0 : i64, scratch_operands = 0 : i64, tpu.core_type = #tpu.core_type<tc>, window_params = [{transform_indices = @transform_0, window_bounds = array<i64: 8, 1024>}, {transform_indices = @transform_1, window_bounds = array<i64: 8, 1024>}, {transform_indices = @transform_2, window_bounds = array<i64: 8, 1024>}]} {
    %c0 = arith.constant 0 : index
    %c0_0 = arith.constant 0 : index
    %0 = vector.load %arg1[%c0, %c0_0] : memref<8x1024xf32, #tpu.memory_space<vmem>>, vector<8x1024xf32>
    %c0_1 = arith.constant 0 : index
    %c0_2 = arith.constant 0 : index
    %1 = vector.load %arg2[%c0_1, %c0_2] : memref<8x1024xf32, #tpu.memory_space<vmem>>, vector<8x1024xf32>
    %2 = arith.mulf %0, %1 : vector<8x1024xf32>
    %3 = math.sin %0 : vector<8x1024xf32>
    %4 = arith.mulf %2, %3 : vector<8x1024xf32>
    %5 = math.exp %1 : vector<8x1024xf32>
    %6 = math.cos %0 : vector<8x1024xf32>
    %7 = arith.mulf %5, %6 : vector<8x1024xf32>
    %8 = arith.addf %4, %7 : vector<8x1024xf32>
    %cst = arith.constant 1.000000e+01 : f32
    %9 = vector.broadcast %cst : f32 to vector<8x1024xf32>
    %10 = arith.mulf %8, %9 : vector<8x1024xf32>
    %c0_3 = arith.constant 0 : index
    %c0_4 = arith.constant 0 : index
    %11 = vector.load %arg3[%c0_3, %c0_4] : memref<8x1024xf32, #tpu.memory_space<vmem>>, vector<8x1024xf32>
    tpu.vector_store %arg3[%c0_3, %c0_4], %10 {strides = array<i32>} : memref<8x1024xf32, #tpu.memory_space<vmem>>, vector<8x1024xf32>,
    return
  }
  func.func @transform_0(%arg0: i32) -> (i32, i32) {
    %c0_i32 = arith.constant 0 : i32
    %c0_i32_0 = arith.constant 0 : i32
    return %arg0, %c0_i32 : i32, i32
  }
  func.func @transform_1(%arg0: i32) -> (i32, i32) {
    %c0_i32 = arith.constant 0 : i32
    %c0_i32_0 = arith.constant 0 : i32
    return %arg0, %c0_i32 : i32, i32
  }
  func.func @transform_2(%arg0: i32) -> (i32, i32) {
    %c0_i32 = arith.constant 0 : i32
    %c0_i32_0 = arith.constant 0 : i32
    return %arg0, %c0_i32 : i32, i32
  }
}

</mosaic_0001>

<llo_original>
// kernel: tpu_custom_call.1
$region0: #{tpu_custom_call.1}
  #allocation0 [shape = 'u32[]', space=smem, size = 0x4, offset = 0x4, fixed_abs, tag = 'smem constant byte address 0x4 - core index']
  #allocation1 [shape = 'u32[144,128]{1,0:T(1,128)}', space=vmem, size = 0x12000, scoped, tag = 'internal scratch']
  %s0 = inlined_call_operand.hbm [shape: f32[2,1024], index: 0, kind: input, shape index: {}]
  %s1 = inlined_call_operand.hbm [shape: f32[2,1024], index: 1, kind: input, shape index: {}]
  %s2 = inlined_call_operand.hbm [shape: f32[2,1024], index: 2, kind: output, shape index: {}]
  %s3 = sld [smem:[#allocation0]]
  $region26: #{tpu_custom_call.1} parent=0
    _
  %s5 = ssub.s32 1, %s3
  %s6 = scalar_select 0, %s5, %s3
  $region1: #{tpu_custom_call.1} parent=0
    #allocation2 [shape = 'u8[32768]{0}', space=vmem, size = 0x8000, scoped, tag = 'input window, operand 0, single buffered']
    #allocation3 [shape = 's32[1]{0}', space=sflag, size = 0x4, scoped, tag = 'scoped memory for tpu_custom_call.1']
    #allocation4 [shape = 's32[1]{0}', space=sflag, size = 0x4, scoped, tag = 'scoped memory for tpu_custom_call.1']
    #allocation5 [shape = 'u8[32768]{0}', space=vmem, size = 0x8000, scoped, tag = 'input window, operand 1, single buffered']
    #allocation6 [shape = 's32[1]{0}', space=sflag, size = 0x4, scoped, tag = 'scoped memory for tpu_custom_call.1']
    #allocation7 [shape = 'u8[32768]{0}', space=vmem, size = 0x8000, scoped, tag = 'output window, operand 0, single buffered']
    %7 = vsyncpa [#allocation3], 0
    %8 = vsyncpa [#allocation6], 0
    %9 = vsyncpa [#allocation4], 0
    // Predicated region
    $region2: #{tpu_custom_call.1} parent=1 // pred_check
      _
    $region3: #{tpu_custom_call.1} parent=1 // pred_check_branch
      %11 = sbr.rel (0) target = $region5
    $region4: #{tpu_custom_call.1} parent=1 // pred_region
      %s13 = ssub.s32 1024, 256
      %14 = vsyncadd [#allocation3], %s13
      %s15 = sshll.u32 [#allocation2], 4
      %s16 = int_to_ptr.vmem [resolvable:$true] %s15
      %21 = dma.hbm_to_vmem [thread:$0]  %s0, 256, %s16, [#allocation3], 256, 256, 16
    $region5: #{tpu_custom_call.1} parent=1 // pred_fallthru
      _
    // Predicated region
    $region6: #{tpu_custom_call.1} parent=1 // pred_check
      _
    $region7: #{tpu_custom_call.1} parent=1 // pred_check_branch
      %23 = sbr.rel (0) target = $region9
    $region8: #{tpu_custom_call.1} parent=1 // pred_region
      %s25 = ssub.s32 1024, 256
      %26 = vsyncadd [#allocation6], %s25
      %s27 = sshll.u32 [#allocation5], 4
      %s28 = int_to_ptr.vmem [resolvable:$true] %s27
      %33 = dma.hbm_to_vmem [thread:$0]  %s1, 256, %s28, [#allocation6], 256, 256, 16
    $region9: #{tpu_custom_call.1} parent=1 // pred_fallthru
      _
    // Predicated region
    $region10: #{tpu_custom_call.1} parent=1 // pred_check
      _
    $region11: #{tpu_custom_call.1} parent=1 // pred_check_branch
      %35 = sbr.rel (0) target = $region13
    $region12: #{tpu_custom_call.1} parent=1 // pred_region
      %36 = dma.done [#allocation3], 1024
    $region13: #{tpu_custom_call.1} parent=1 // pred_fallthru
      _
    // Predicated region
    $region14: #{tpu_custom_call.1} parent=1 // pred_check
      _
    $region15: #{tpu_custom_call.1} parent=1 // pred_check_branch
      %38 = sbr.rel (0) target = $region17
    $region16: #{tpu_custom_call.1} parent=1 // pred_region
      %39 = dma.done [#allocation6], 1024
    $region17: #{tpu_custom_call.1} parent=1 // pred_fallthru
      _
    %v40 = vld [vmem:[#allocation2] sm:$0xff]
    %v41 = vld [vmem:[#allocation2 + $0x8] sm:$0xff]
    %v42 = vld [vmem:[#allocation2 + $0x10] sm:$0xff]
    %v43 = vld [vmem:[#allocation2 + $0x18] sm:$0xff]
    %v44 = vld [vmem:[#allocation2 + $0x20] sm:$0xff]
    %v45 = vld [vmem:[#allocation2 + $0x28] sm:$0xff]
    %v46 = vld [vmem:[#allocation2 + $0x30] sm:$0xff]
    %v47 = vld [vmem:[#allocation2 + $0x38] sm:$0xff]
    %v48 = vld [vmem:[#allocation5] sm:$0xff]
    %v49 = vld [vmem:[#allocation5 + $0x8] sm:$0xff]
    %v50 = vld [vmem:[#allocation5 + $0x10] sm:$0xff]
    %v51 = vld [vmem:[#allocation5 + $0x18] sm:$0xff]
    %v52 = vld [vmem:[#allocation5 + $0x20] sm:$0xff]
    %v53 = vld [vmem:[#allocation5 + $0x28] sm:$0xff]
    %v54 = vld [vmem:[#allocation5 + $0x30] sm:$0xff]
    %v55 = vld [vmem:[#allocation5 + $0x38] sm:$0xff]
    %v56 = vmul.f32 %v40, %v48
    %v57 = vmul.f32 %v41, %v49
    %v58 = vmul.f32 %v42, %v50
    %v59 = vmul.f32 %v43, %v51
    %v60 = vmul.f32 %v44, %v52
    %v61 = vmul.f32 %v45, %v53
    %v62 = vmul.f32 %v46, %v54
    %v63 = vmul.f32 %v47, %v55
    %v64 = vand.u32 2147483647, %v40
    %vm65 = vcmp.le.f32.partialorder %v64, 0.7853982
    %vm66 = vcmp.lt.s32.totalorder %v40, 0
    %v67 = vand.u32 %v40, 2139095040
    %v68 = vshrl.u32 %v67, 23
    %v69 = vsub.s32 %v68, 127
    %v70 = vand.u32 2147483647, %v40
    %v71 = vand.u32 %v70, 8388607
    %v72 = vor.u32 %v71, 8388608
    %v73 = vsub.s32 0, %v72
    %v74 = vadd.s32 %v69, 1
    %vm75 = vcmp.gt.s32.totalorder %v74, 0
    %v76 = vsel %vm75, %v74, 0
    %v77 = vshrl.u32 %v76, 5
    %v78 = vand.u32 %v76, 31
    %v79 = vsub.s32 32, %v78
    %v80 = vshrl.u32 683565275, %v79
    %v81 = vshll.u32 683565275, %v78
    %v82 = vshrl.u32 2475754826, %v79
    %v83 = vor.u32 %v81, %v82
    %v84 = vshll.u32 2475754826, %v78
    %v85 = vshrl.u32 2131351028, %v79
    %v86 = vor.u32 %v84, %v85
    %v87 = vshll.u32 2131351028, %v78
    %v88 = vshrl.u32 2102212464, %v79
    %v89 = vor.u32 %v87, %v88
    %v90 = vshll.u32 2102212464, %v78
    %v91 = vshrl.u32 920167782, %v79
    %v92 = vor.u32 %v90, %v91
    %v93 = vshll.u32 920167782, %v78
    %v94 = vshrl.u32 1326507024, %v79
    %v95 = vor.u32 %v93, %v94
    %vm96 = vcmp.lt.s32.totalorder %v77, 1
    %vm97 = vcmp.lt.s32.totalorder %v77, 2
    %vm98 = vcmp.lt.s32.totalorder %v77, 3
    %vm99 = vcmp.lt.s32.totalorder %v77, 4
    %v100 = vsel %vm96, %v80, %v83
    %v101 = vsel %vm99, %v89, 2102212464
    %v102 = vsel %vm98, %v86, %v101
    %v103 = vsel %vm97, %v100, %v102
    %v104 = vsel %vm96, %v83, %v86
    %v105 = vsel %vm99, %v92, 920167782
    %v106 = vsel %vm98, %v89, %v105
    %v107 = vsel %vm97, %v104, %v106
    %v108 = vsel %vm96, %v86, %v89
    %v109 = vsel %vm99, %v95, 1326507024
    %v110 = vsel %vm98, %v92, %v109
    %v111 = vsel %vm97, %v108, %v110
    %v112 = vshll.u32 %v72, 8
    %v113 = vmul.u32.u64.compose %v112, %v111
    %v114 = vextract.low.u32 %v113
    %v115 = vextract.high.u32 %v113
    %v116 = vmul.u32.u64.compose %v112, %v107
    %v117 = vextract.low.u32 %v116
    %v118 = vextract.high.u32 %v116
    %v119 = vmul.u32 %v112, %v103
    %v120 = vadd.s32 %v115, %v117
    %vm121 = vc.u32 %v115, %v117
    %v122 = vadd.s32 %v118, 1
    %v123 = vsel %vm121, %v122, %v118
    %v124 = vadd.s32 %v119, %v123
    %v125 = vadd.s32 %v124, 536870912
    %v126 = vshrl.u32 %v125, 30
    %v127 = vshll.u32 %v126, 30
    %v128 = vsub.s32 %v124, %v127
    %vm129 = vcmp.lt.s32.totalorder %v128, 0
    %v130 = vsub.s32 0, %v128
    %v131 = vsel %vm129, %v130, %v128
    %v132 = vclz %v131
    %v133 = vsub.s32 %v132, 2
    %vm134 = vcmp.gt.s32.totalorder 0, %v133
    %v135 = vsel %vm134, 0, %v133
    %v136 = vsub.s32 32, %v135
    %v137 = vshll.u32 %v128, %v135
    %v138 = vshrl.u32 %v120, %v136
    %v139 = vor.u32 %v137, %v138
    %v140 = vsub.s32 4294967266, %v135
    %v141 = vadd.s32 %v140, 127
    %v142 = vshll.u32 %v141, 23
    %v143 = vor.u32 4788187, %v142
    %v144 = vand.u32 2147483647, %v143
    %v146 = vcvt.s32.f32 %v139
    %v147 = vmul.f32 %v146, %v144
    %v148 = vxor.u32 %v147, 2147483648
    %v149 = vsel %vm66, %v148, %v147
    %v150 = vsub.s32 4, %v126
    %v151 = vsel %vm66, %v150, %v126
    %v152 = vsel %vm65, %v40, %v149
    %v153 = vsel %vm65, 0, %v151
    %v154 = vcosq.f32.pop %v152
    %v155 = vsinq.f32.pop %v152
    %vm156 = vweird.f32 %v40
    %v157 = vadd.s32 %v153, 3
    %v158 = vand.u32 %v157, 3
    %vm159 = vcmp.lt.s32.totalorder %v158, 2
    %vm160 = vcmp.eq.s32.totalorder %v158, 0
    %v161 = vxor.u32 %v155, 2147483648
    %v162 = vsel %vm160, %v154, %v161
    %vm163 = vcmp.eq.s32.totalorder %v158, 2
    %v164 = vxor.u32 %v154, 2147483648
    %v165 = vsel %vm163, %v164, %v155
    %v166 = vsel %vm159, %v162, %v165
    %v167 = vsel %vm156, nan, %v166
    %v168 = vand.u32 2147483647, %v41
    %vm169 = vcmp.le.f32.partialorder %v168, 0.7853982
    %vm170 = vcmp.lt.s32.totalorder %v41, 0
    %v171 = vand.u32 %v41, 2139095040
    %v172 = vshrl.u32 %v171, 23
    %v173 = vsub.s32 %v172, 127
    %v174 = vand.u32 2147483647, %v41
    %v175 = vand.u32 %v174, 8388607
    %v176 = vor.u32 %v175, 8388608
    %v177 = vsub.s32 0, %v176
    %v178 = vadd.s32 %v173, 1
    %vm179 = vcmp.gt.s32.totalorder %v178, 0
    %v180 = vsel %vm179, %v178, 0
    %v181 = vshrl.u32 %v180, 5
    %v182 = vand.u32 %v180, 31
    %v183 = vsub.s32 32, %v182
    %v184 = vshrl.u32 683565275, %v183
    %v185 = vshll.u32 683565275, %v182
    %v186 = vshrl.u32 2475754826, %v183
    %v187 = vor.u32 %v185, %v186
    %v188 = vshll.u32 2475754826, %v182
    %v189 = vshrl.u32 2131351028, %v183
    %v190 = vor.u32 %v188, %v189
    %v191 = vshll.u32 2131351028, %v182
    %v192 = vshrl.u32 2102212464, %v183
    %v193 = vor.u32 %v191, %v192
    %v194 = vshll.u32 2102212464, %v182
    %v195 = vshrl.u32 920167782, %v183
    %v196 = vor.u32 %v194, %v195
    %v197 = vshll.u32 920167782, %v182
    %v198 = vshrl.u32 1326507024, %v183
    %v199 = vor.u32 %v197, %v198
    %vm200 = vcmp.lt.s32.totalorder %v181, 1
    %vm201 = vcmp.lt.s32.totalorder %v181, 2
    %vm202 = vcmp.lt.s32.totalorder %v181, 3
    %vm203 = vcmp.lt.s32.totalorder %v181, 4
    %v204 = vsel %vm200, %v184, %v187
    %v205 = vsel %vm203, %v193, 2102212464
    %v206 = vsel %vm202, %v190, %v205
    %v207 = vsel %vm201, %v204, %v206
    %v208 = vsel %vm200, %v187, %v190
    %v209 = vsel %vm203, %v196, 920167782
    %v210 = vsel %vm202, %v193, %v209
    %v211 = vsel %vm201, %v208, %v210
    %v212 = vsel %vm200, %v190, %v193
    %v213 = vsel %vm203, %v199, 1326507024
    %v214 = vsel %vm202, %v196, %v213
    %v215 = vsel %vm201, %v212, %v214
    %v216 = vshll.u32 %v176, 8
    %v217 = vmul.u32.u64.compose %v216, %v215
    %v218 = vextract.low.u32 %v217
    %v219 = vextract.high.u32 %v217
    %v220 = vmul.u32.u64.compose %v216, %v211
    %v221 = vextract.low.u32 %v220
    %v222 = vextract.high.u32 %v220
    %v223 = vmul.u32 %v216, %v207
    %v224 = vadd.s32 %v219, %v221
    %vm225 = vc.u32 %v219, %v221
    %v226 = vadd.s32 %v222, 1
    %v227 = vsel %vm225, %v226, %v222
    %v228 = vadd.s32 %v223, %v227
    %v229 = vadd.s32 %v228, 536870912
    %v230 = vshrl.u32 %v229, 30
    %v231 = vshll.u32 %v230, 30
    %v232 = vsub.s32 %v228, %v231
    %vm233 = vcmp.lt.s32.totalorder %v232, 0
    %v234 = vsub.s32 0, %v232
    %v235 = vsel %vm233, %v234, %v232
    %v236 = vclz %v235
    %v237 = vsub.s32 %v236, 2
    %vm238 = vcmp.gt.s32.totalorder 0, %v237
    %v239 = vsel %vm238, 0, %v237
    %v240 = vsub.s32 32, %v239
    %v241 = vshll.u32 %v232, %v239
    %v242 = vshrl.u32 %v224, %v240
    %v243 = vor.u32 %v241, %v242
    %v244 = vsub.s32 4294967266, %v239
    %v245 = vadd.s32 %v244, 127
    %v246 = vshll.u32 %v245, 23
    %v247 = vor.u32 4788187, %v246
    %v248 = vand.u32 2147483647, %v247
    %v250 = vcvt.s32.f32 %v243
    %v251 = vmul.f32 %v250, %v248
    %v252 = vxor.u32 %v251, 2147483648
    %v253 = vsel %vm170, %v252, %v251
    %v254 = vsub.s32 4, %v230
    %v255 = vsel %vm170, %v254, %v230
    %v256 = vsel %vm169, %v41, %v253
    %v257 = vsel %vm169, 0, %v255
    %v258 = vcosq.f32.pop %v256
    %v259 = vsinq.f32.pop %v256
    %vm260 = vweird.f32 %v41
    %v261 = vadd.s32 %v257, 3
    %v262 = vand.u32 %v261, 3
    %vm263 = vcmp.lt.s32.totalorder %v262, 2
    %vm264 = vcmp.eq.s32.totalorder %v262, 0
    %v265 = vxor.u32 %v259, 2147483648
    %v266 = vsel %vm264, %v258, %v265
    %vm267 = vcmp.eq.s32.totalorder %v262, 2
    %v268 = vxor.u32 %v258, 2147483648
    %v269 = vsel %vm267, %v268, %v259
    %v270 = vsel %vm263, %v266, %v269
    %v271 = vsel %vm260, nan, %v270
    %v272 = vand.u32 2147483647, %v42
    %vm273 = vcmp.le.f32.partialorder %v272, 0.7853982
    %vm274 = vcmp.lt.s32.totalorder %v42, 0
    %v275 = vand.u32 %v42, 2139095040
    %v276 = vshrl.u32 %v275, 23
    %v277 = vsub.s32 %v276, 127
    %v278 = vand.u32 2147483647, %v42
    %v279 = vand.u32 %v278, 8388607
    %v280 = vor.u32 %v279, 8388608
    %v281 = vsub.s32 0, %v280
    %v282 = vadd.s32 %v277, 1
    %vm283 = vcmp.gt.s32.totalorder %v282, 0
    %v284 = vsel %vm283, %v282, 0
    %v285 = vshrl.u32 %v284, 5
    %v286 = vand.u32 %v284, 31
    %v287 = vsub.s32 32, %v286
    %v288 = vshrl.u32 683565275, %v287
    %v289 = vshll.u32 683565275, %v286
    %v290 = vshrl.u32 2475754826, %v287
    %v291 = vor.u32 %v289, %v290
    %v292 = vshll.u32 2475754826, %v286
    %v293 = vshrl.u32 2131351028, %v287
    %v294 = vor.u32 %v292, %v293
    %v295 = vshll.u32 2131351028, %v286
    %v296 = vshrl.u32 2102212464, %v287
    %v297 = vor.u32 %v295, %v296
    %v298 = vshll.u32 2102212464, %v286
    %v299 = vshrl.u32 920167782, %v287
    %v300 = vor.u32 %v298, %v299
    %v301 = vshll.u32 920167782, %v286
    %v302 = vshrl.u32 1326507024, %v287
    %v303 = vor.u32 %v301, %v302
    %vm304 = vcmp.lt.s32.totalorder %v285, 1
    %vm305 = vcmp.lt.s32.totalorder %v285, 2
    %vm306 = vcmp.lt.s32.totalorder %v285, 3
    %vm307 = vcmp.lt.s32.totalorder %v285, 4
    %v308 = vsel %vm304, %v288, %v291
    %v309 = vsel %vm307, %v297, 2102212464
    %v310 = vsel %vm306, %v294, %v309
    %v311 = vsel %vm305, %v308, %v310
    %v312 = vsel %vm304, %v291, %v294
    %v313 = vsel %vm307, %v300, 920167782
    %v314 = vsel %vm306, %v297, %v313
    %v315 = vsel %vm305, %v312, %v314
    %v316 = vsel %vm304, %v294, %v297
    %v317 = vsel %vm307, %v303, 1326507024
    %v318 = vsel %vm306, %v300, %v317
    %v319 = vsel %vm305, %v316, %v318
    %v320 = vshll.u32 %v280, 8
    %v321 = vmul.u32.u64.compose %v320, %v319
    %v322 = vextract.low.u32 %v321
    %v323 = vextract.high.u32 %v321
    %v324 = vmul.u32.u64.compose %v320, %v315
    %v325 = vextract.low.u32 %v324
    %v326 = vextract.high.u32 %v324
    %v327 = vmul.u32 %v320, %v311
    %v328 = vadd.s32 %v323, %v325
    %vm329 = vc.u32 %v323, %v325
    %v330 = vadd.s32 %v326, 1
    %v331 = vsel %vm329, %v330, %v326
    %v332 = vadd.s32 %v327, %v331
    %v333 = vadd.s32 %v332, 536870912
    %v334 = vshrl.u32 %v333, 30
    %v335 = vshll.u32 %v334, 30
    %v336 = vsub.s32 %v332, %v335
    %vm337 = vcmp.lt.s32.totalorder %v336, 0
    %v338 = vsub.s32 0, %v336
    %v339 = vsel %vm337, %v338, %v336
    %v340 = vclz %v339
    %v341 = vsub.s32 %v340, 2
    %vm342 = vcmp.gt.s32.totalorder 0, %v341
    %v343 = vsel %vm342, 0, %v341
    %v344 = vsub.s32 32, %v343
    %v345 = vshll.u32 %v336, %v343
    %v346 = vshrl.u32 %v328, %v344
    %v347 = vor.u32 %v345, %v346
    %v348 = vsub.s32 4294967266, %v343
    %v349 = vadd.s32 %v348, 127
    %v350 = vshll.u32 %v349, 23
    %v351 = vor.u32 4788187, %v350
    %v352 = vand.u32 2147483647, %v351
    %v354 = vcvt.s32.f32 %v347
    %v355 = vmul.f32 %v354, %v352
    %v356 = vxor.u32 %v355, 2147483648
    %v357 = vsel %vm274, %v356, %v355
    %v358 = vsub.s32 4, %v334
    %v359 = vsel %vm274, %v358, %v334
    %v360 = vsel %vm273, %v42, %v357
    %v361 = vsel %vm273, 0, %v359
    %v362 = vcosq.f32.pop %v360
    %v363 = vsinq.f32.pop %v360
    %vm364 = vweird.f32 %v42
    %v365 = vadd.s32 %v361, 3
    %v366 = vand.u32 %v365, 3
    %vm367 = vcmp.lt.s32.totalorder %v366, 2
    %vm368 = vcmp.eq.s32.totalorder %v366, 0
    %v369 = vxor.u32 %v363, 2147483648
    %v370 = vsel %vm368, %v362, %v369
    %vm371 = vcmp.eq.s32.totalorder %v366, 2
    %v372 = vxor.u32 %v362, 2147483648
    %v373 = vsel %vm371, %v372, %v363
    %v374 = vsel %vm367, %v370, %v373
    %v375 = vsel %vm364, nan, %v374
    %v376 = vand.u32 2147483647, %v43
    %vm377 = vcmp.le.f32.partialorder %v376, 0.7853982
    %vm378 = vcmp.lt.s32.totalorder %v43, 0
    %v379 = vand.u32 %v43, 2139095040
    %v380 = vshrl.u32 %v379, 23
    %v381 = vsub.s32 %v380, 127
    %v382 = vand.u32 2147483647, %v43
    %v383 = vand.u32 %v382, 8388607
    %v384 = vor.u32 %v383, 8388608
    %v385 = vsub.s32 0, %v384
    %v386 = vadd.s32 %v381, 1
    %vm387 = vcmp.gt.s32.totalorder %v386, 0
    %v388 = vsel %vm387, %v386, 0
    %v389 = vshrl.u32 %v388, 5
    %v390 = vand.u32 %v388, 31
    %v391 = vsub.s32 32, %v390
    %v392 = vshrl.u32 683565275, %v391
    %v393 = vshll.u32 683565275, %v390
    %v394 = vshrl.u32 2475754826, %v391
    %v395 = vor.u32 %v393, %v394
    %v396 = vshll.u32 2475754826, %v390
    %v397 = vshrl.u32 2131351028, %v391
    %v398 = vor.u32 %v396, %v397
    %v399 = vshll.u32 2131351028, %v390
    %v400 = vshrl.u32 2102212464, %v391
    %v401 = vor.u32 %v399, %v400
    %v402 = vshll.u32 2102212464, %v390
    %v403 = vshrl.u32 920167782, %v391
    %v404 = vor.u32 %v402, %v403
    %v405 = vshll.u32 920167782, %v390
    %v406 = vshrl.u32 1326507024, %v391
    %v407 = vor.u32 %v405, %v406
    %vm408 = vcmp.lt.s32.totalorder %v389, 1
    %vm409 = vcmp.lt.s32.totalorder %v389, 2
    %vm410 = vcmp.lt.s32.totalorder %v389, 3
    %vm411 = vcmp.lt.s32.totalorder %v389, 4
    %v412 = vsel %vm408, %v392, %v395
    %v413 = vsel %vm411, %v401, 2102212464
    %v414 = vsel %vm410, %v398, %v413
    %v415 = vsel %vm409, %v412, %v414
    %v416 = vsel %vm408, %v395, %v398
    %v417 = vsel %vm411, %v404, 920167782
    %v418 = vsel %vm410, %v401, %v417
    %v419 = vsel %vm409, %v416, %v418
    %v420 = vsel %vm408, %v398, %v401
    %v421 = vsel %vm411, %v407, 1326507024
    %v422 = vsel %vm410, %v404, %v421
    %v423 = vsel %vm409, %v420, %v422
    %v424 = vshll.u32 %v384, 8
    %v425 = vmul.u32.u64.compose %v424, %v423
    %v426 = vextract.low.u32 %v425
    %v427 = vextract.high.u32 %v425
    %v428 = vmul.u32.u64.compose %v424, %v419
    %v429 = vextract.low.u32 %v428
    %v430 = vextract.high.u32 %v428
    %v431 = vmul.u32 %v424, %v415
    %v432 = vadd.s32 %v427, %v429
    %vm433 = vc.u32 %v427, %v429
    %v434 = vadd.s32 %v430, 1
    %v435 = vsel %vm433, %v434, %v430
    %v436 = vadd.s32 %v431, %v435
    %v437 = vadd.s32 %v436, 536870912
    %v438 = vshrl.u32 %v437, 30
    %v439 = vshll.u32 %v438, 30
    %v440 = vsub.s32 %v436, %v439
    %vm441 = vcmp.lt.s32.totalorder %v440, 0
    %v442 = vsub.s32 0, %v440
    %v443 = vsel %vm441, %v442, %v440
    %v444 = vclz %v443
    %v445 = vsub.s32 %v444, 2
    %vm446 = vcmp.gt.s32.totalorder 0, %v445
    %v447 = vsel %vm446, 0, %v445
    %v448 = vsub.s32 32, %v447
    %v449 = vshll.u32 %v440, %v447
    %v450 = vshrl.u32 %v432, %v448
    %v451 = vor.u32 %v449, %v450
    %v452 = vsub.s32 4294967266, %v447
    %v453 = vadd.s32 %v452, 127
    %v454 = vshll.u32 %v453, 23
    %v455 = vor.u32 4788187, %v454
    %v456 = vand.u32 2147483647, %v455
    %v458 = vcvt.s32.f32 %v451
    %v459 = vmul.f32 %v458, %v456
    %v460 = vxor.u32 %v459, 2147483648
    %v461 = vsel %vm378, %v460, %v459
    %v462 = vsub.s32 4, %v438
    %v463 = vsel %vm378, %v462, %v438
    %v464 = vsel %vm377, %v43, %v461
    %v465 = vsel %vm377, 0, %v463
    %v466 = vcosq.f32.pop %v464
    %v467 = vsinq.f32.pop %v464
    %vm468 = vweird.f32 %v43
    %v469 = vadd.s32 %v465, 3
    %v470 = vand.u32 %v469, 3
    %vm471 = vcmp.lt.s32.totalorder %v470, 2
    %vm472 = vcmp.eq.s32.totalorder %v470, 0
    %v473 = vxor.u32 %v467, 2147483648
    %v474 = vsel %vm472, %v466, %v473
    %vm475 = vcmp.eq.s32.totalorder %v470, 2
    %v476 = vxor.u32 %v466, 2147483648
    %v477 = vsel %vm475, %v476, %v467
    %v478 = vsel %vm471, %v474, %v477
    %v479 = vsel %vm468, nan, %v478
    %v480 = vand.u32 2147483647, %v44
    %vm481 = vcmp.le.f32.partialorder %v480, 0.7853982
    %vm482 = vcmp.lt.s32.totalorder %v44, 0
    %v483 = vand.u32 %v44, 2139095040
    %v484 = vshrl.u32 %v483, 23
    %v485 = vsub.s32 %v484, 127
    %v486 = vand.u32 2147483647, %v44
    %v487 = vand.u32 %v486, 8388607
    %v488 = vor.u32 %v487, 8388608
    %v489 = vsub.s32 0, %v488
    %v490 = vadd.s32 %v485, 1
    %vm491 = vcmp.gt.s32.totalorder %v490, 0
    %v492 = vsel %vm491, %v490, 0
    %v493 = vshrl.u32 %v492, 5
    %v494 = vand.u32 %v492, 31
    %v495 = vsub.s32 32, %v494
    %v496 = vshrl.u32 683565275, %v495
    %v497 = vshll.u32 683565275, %v494
    %v498 = vshrl.u32 2475754826, %v495
    %v499 = vor.u32 %v497, %v498
    %v500 = vshll.u32 2475754826, %v494
    %v501 = vshrl.u32 2131351028, %v495
    %v502 = vor.u32 %v500, %v501
    %v503 = vshll.u32 2131351028, %v494
    %v504 = vshrl.u32 2102212464, %v495
    %v505 = vor.u32 %v503, %v504
    %v506 = vshll.u32 2102212464, %v494
    %v507 = vshrl.u32 920167782, %v495
    %v508 = vor.u32 %v506, %v507
    %v509 = vshll.u32 920167782, %v494
    %v510 = vshrl.u32 1326507024, %v495
    %v511 = vor.u32 %v509, %v510
    %vm512 = vcmp.lt.s32.totalorder %v493, 1
    %vm513 = vcmp.lt.s32.totalorder %v493, 2
    %vm514 = vcmp.lt.s32.totalorder %v493, 3
    %vm515 = vcmp.lt.s32.totalorder %v493, 4
    %v516 = vsel %vm512, %v496, %v499
    %v517 = vsel %vm515, %v505, 2102212464
    %v518 = vsel %vm514, %v502, %v517
    %v519 = vsel %vm513, %v516, %v518
    %v520 = vsel %vm512, %v499, %v502
    %v521 = vsel %vm515, %v508, 920167782
    %v522 = vsel %vm514, %v505, %v521
    %v523 = vsel %vm513, %v520, %v522
    %v524 = vsel %vm512, %v502, %v505
    %v525 = vsel %vm515, %v511, 1326507024
    %v526 = vsel %vm514, %v508, %v525
    %v527 = vsel %vm513, %v524, %v526
    %v528 = vshll.u32 %v488, 8
    %v529 = vmul.u32.u64.compose %v528, %v527
    %v530 = vextract.low.u32 %v529
    %v531 = vextract.high.u32 %v529
    %v532 = vmul.u32.u64.compose %v528, %v523
    %v533 = vextract.low.u32 %v532
    %v534 = vextract.high.u32 %v532
    %v535 = vmul.u32 %v528, %v519
    %v536 = vadd.s32 %v531, %v533
    %vm537 = vc.u32 %v531, %v533
    %v538 = vadd.s32 %v534, 1
    %v539 = vsel %vm537, %v538, %v534
    %v540 = vadd.s32 %v535, %v539
    %v541 = vadd.s32 %v540, 536870912
    %v542 = vshrl.u32 %v541, 30
    %v543 = vshll.u32 %v542, 30
    %v544 = vsub.s32 %v540, %v543
    %vm545 = vcmp.lt.s32.totalorder %v544, 0
    %v546 = vsub.s32 0, %v544
    %v547 = vsel %vm545, %v546, %v544
    %v548 = vclz %v547
    %v549 = vsub.s32 %v548, 2
    %vm550 = vcmp.gt.s32.totalorder 0, %v549
    %v551 = vsel %vm550, 0, %v549
    %v552 = vsub.s32 32, %v551
    %v553 = vshll.u32 %v544, %v551
    %v554 = vshrl.u32 %v536, %v552
    %v555 = vor.u32 %v553, %v554
    %v556 = vsub.s32 4294967266, %v551
    %v557 = vadd.s32 %v556, 127
    %v558 = vshll.u32 %v557, 23
    %v559 = vor.u32 4788187, %v558
    %v560 = vand.u32 2147483647, %v559
    %v562 = vcvt.s32.f32 %v555
    %v563 = vmul.f32 %v562, %v560
    %v564 = vxor.u32 %v563, 2147483648
    %v565 = vsel %vm482, %v564, %v563
    %v566 = vsub.s32 4, %v542
    %v567 = vsel %vm482, %v566, %v542
    %v568 = vsel %vm481, %v44, %v565
    %v569 = vsel %vm481, 0, %v567
    %v570 = vcosq.f32.pop %v568
    %v571 = vsinq.f32.pop %v568
    %vm572 = vweird.f32 %v44
    %v573 = vadd.s32 %v569, 3
    %v574 = vand.u32 %v573, 3
    %vm575 = vcmp.lt.s32.totalorder %v574, 2
    %vm576 = vcmp.eq.s32.totalorder %v574, 0
    %v577 = vxor.u32 %v571, 2147483648
    %v578 = vsel %vm576, %v570, %v577
    %vm579 = vcmp.eq.s32.totalorder %v574, 2
    %v580 = vxor.u32 %v570, 2147483648
    %v581 = vsel %vm579, %v580, %v571
    %v582 = vsel %vm575, %v578, %v581
    %v583 = vsel %vm572, nan, %v582
    %v584 = vand.u32 2147483647, %v45
    %vm585 = vcmp.le.f32.partialorder %v584, 0.7853982
    %vm586 = vcmp.lt.s32.totalorder %v45, 0
    %v587 = vand.u32 %v45, 2139095040
    %v588 = vshrl.u32 %v587, 23
    %v589 = vsub.s32 %v588, 127
    %v590 = vand.u32 2147483647, %v45
    %v591 = vand.u32 %v590, 8388607
    %v592 = vor.u32 %v591, 8388608
    %v593 = vsub.s32 0, %v592
    %v594 = vadd.s32 %v589, 1
    %vm595 = vcmp.gt.s32.totalorder %v594, 0
    %v596 = vsel %vm595, %v594, 0
    %v597 = vshrl.u32 %v596, 5
    %v598 = vand.u32 %v596, 31
    %v599 = vsub.s32 32, %v598
    %v600 = vshrl.u32 683565275, %v599
    %v601 = vshll.u32 683565275, %v598
    %v602 = vshrl.u32 2475754826, %v599
    %v603 = vor.u32 %v601, %v602
    %v604 = vshll.u32 2475754826, %v598
    %v605 = vshrl.u32 2131351028, %v599
    %v606 = vor.u32 %v604, %v605
    %v607 = vshll.u32 2131351028, %v598
    %v608 = vshrl.u32 2102212464, %v599
    %v609 = vor.u32 %v607, %v608
    %v610 = vshll.u32 2102212464, %v598
    %v611 = vshrl.u32 920167782, %v599
    %v612 = vor.u32 %v610, %v611
    %v613 = vshll.u32 920167782, %v598
    %v614 = vshrl.u32 1326507024, %v599
    %v615 = vor.u32 %v613, %v614
    %vm616 = vcmp.lt.s32.totalorder %v597, 1
    %vm617 = vcmp.lt.s32.totalorder %v597, 2
    %vm618 = vcmp.lt.s32.totalorder %v597, 3
    %vm619 = vcmp.lt.s32.totalorder %v597, 4
    %v620 = vsel %vm616, %v600, %v603
    %v621 = vsel %vm619, %v609, 2102212464
    %v622 = vsel %vm618, %v606, %v621
    %v623 = vsel %vm617, %v620, %v622
    %v624 = vsel %vm616, %v603, %v606
    %v625 = vsel %vm619, %v612, 920167782
    %v626 = vsel %vm618, %v609, %v625
    %v627 = vsel %vm617, %v624, %v626
    %v628 = vsel %vm616, %v606, %v609
    %v629 = vsel %vm619, %v615, 1326507024
    %v630 = vsel %vm618, %v612, %v629
    %v631 = vsel %vm617, %v628, %v630
    %v632 = vshll.u32 %v592, 8
    %v633 = vmul.u32.u64.compose %v632, %v631
    %v634 = vextract.low.u32 %v633
    %v635 = vextract.high.u32 %v633
    %v636 = vmul.u32.u64.compose %v632, %v627
    %v637 = vextract.low.u32 %v636
    %v638 = vextract.high.u32 %v636
    %v639 = vmul.u32 %v632, %v623
    %v640 = vadd.s32 %v635, %v637
    %vm641 = vc.u32 %v635, %v637
    %v642 = vadd.s32 %v638, 1
    %v643 = vsel %vm641, %v642, %v638
    %v644 = vadd.s32 %v639, %v643
    %v645 = vadd.s32 %v644, 536870912
    %v646 = vshrl.u32 %v645, 30
    %v647 = vshll.u32 %v646, 30
    %v648 = vsub.s32 %v644, %v647
    %vm649 = vcmp.lt.s32.totalorder %v648, 0
    %v650 = vsub.s32 0, %v648
    %v651 = vsel %vm649, %v650, %v648
    %v652 = vclz %v651
    %v653 = vsub.s32 %v652, 2
    %vm654 = vcmp.gt.s32.totalorder 0, %v653
    %v655 = vsel %vm654, 0, %v653
    %v656 = vsub.s32 32, %v655
    %v657 = vshll.u32 %v648, %v655
    %v658 = vshrl.u32 %v640, %v656
    %v659 = vor.u32 %v657, %v658
    %v660 = vsub.s32 4294967266, %v655
    %v661 = vadd.s32 %v660, 127
    %v662 = vshll.u32 %v661, 23
    %v663 = vor.u32 4788187, %v662
    %v664 = vand.u32 2147483647, %v663
    %v666 = vcvt.s32.f32 %v659
    %v667 = vmul.f32 %v666, %v664
    %v668 = vxor.u32 %v667, 2147483648
    %v669 = vsel %vm586, %v668, %v667
    %v670 = vsub.s32 4, %v646
    %v671 = vsel %vm586, %v670, %v646
    %v672 = vsel %vm585, %v45, %v669
    %v673 = vsel %vm585, 0, %v671
    %v674 = vcosq.f32.pop %v672
    %v675 = vsinq.f32.pop %v672
    %vm676 = vweird.f32 %v45
    %v677 = vadd.s32 %v673, 3
    %v678 = vand.u32 %v677, 3
    %vm679 = vcmp.lt.s32.totalorder %v678, 2
    %vm680 = vcmp.eq.s32.totalorder %v678, 0
    %v681 = vxor.u32 %v675, 2147483648
    %v682 = vsel %vm680, %v674, %v681
    %vm683 = vcmp.eq.s32.totalorder %v678, 2
    %v684 = vxor.u32 %v674, 2147483648
    %v685 = vsel %vm683, %v684, %v675
    %v686 = vsel %vm679, %v682, %v685
    %v687 = vsel %vm676, nan, %v686
    %v688 = vand.u32 2147483647, %v46
    %vm689 = vcmp.le.f32.partialorder %v688, 0.7853982
    %vm690 = vcmp.lt.s32.totalorder %v46, 0
    %v691 = vand.u32 %v46, 2139095040
    %v692 = vshrl.u32 %v691, 23
    %v693 = vsub.s32 %v692, 127
    %v694 = vand.u32 2147483647, %v46
    %v695 = vand.u32 %v694, 8388607
    %v696 = vor.u32 %v695, 8388608
    %v697 = vsub.s32 0, %v696
    %v698 = vadd.s32 %v693, 1
    %vm699 = vcmp.gt.s32.totalorder %v698, 0
    %v700 = vsel %vm699, %v698, 0
    %v701 = vshrl.u32 %v700, 5
    %v702 = vand.u32 %v700, 31
    %v703 = vsub.s32 32, %v702
    %v704 = vshrl.u32 683565275, %v703
    %v705 = vshll.u32 683565275, %v702
    %v706 = vshrl.u32 2475754826, %v703
    %v707 = vor.u32 %v705, %v706
    %v708 = vshll.u32 2475754826, %v702
    %v709 = vshrl.u32 2131351028, %v703
    %v710 = vor.u32 %v708, %v709
    %v711 = vshll.u32 2131351028, %v702
    %v712 = vshrl.u32 2102212464, %v703
    %v713 = vor.u32 %v711, %v712
    %v714 = vshll.u32 2102212464, %v702
    %v715 = vshrl.u32 920167782, %v703
    %v716 = vor.u32 %v714, %v715
    %v717 = vshll.u32 920167782, %v702
    %v718 = vshrl.u32 1326507024, %v703
    %v719 = vor.u32 %v717, %v718
    %vm720 = vcmp.lt.s32.totalorder %v701, 1
    %vm721 = vcmp.lt.s32.totalorder %v701, 2
    %vm722 = vcmp.lt.s32.totalorder %v701, 3
    %vm723 = vcmp.lt.s32.totalorder %v701, 4
    %v724 = vsel %vm720, %v704, %v707
    %v725 = vsel %vm723, %v713, 2102212464
    %v726 = vsel %vm722, %v710, %v725
    %v727 = vsel %vm721, %v724, %v726
    %v728 = vsel %vm720, %v707, %v710
    %v729 = vsel %vm723, %v716, 920167782
    %v730 = vsel %vm722, %v713, %v729
    %v731 = vsel %vm721, %v728, %v730
    %v732 = vsel %vm720, %v710, %v713
    %v733 = vsel %vm723, %v719, 1326507024
    %v734 = vsel %vm722, %v716, %v733
    %v735 = vsel %vm721, %v732, %v734
    %v736 = vshll.u32 %v696, 8
    %v737 = vmul.u32.u64.compose %v736, %v735
    %v738 = vextract.low.u32 %v737
    %v739 = vextract.high.u32 %v737
    %v740 = vmul.u32.u64.compose %v736, %v731
    %v741 = vextract.low.u32 %v740
    %v742 = vextract.high.u32 %v740
    %v743 = vmul.u32 %v736, %v727
    %v744 = vadd.s32 %v739, %v741
    %vm745 = vc.u32 %v739, %v741
    %v746 = vadd.s32 %v742, 1
    %v747 = vsel %vm745, %v746, %v742
    %v748 = vadd.s32 %v743, %v747
    %v749 = vadd.s32 %v748, 536870912
    %v750 = vshrl.u32 %v749, 30
    %v751 = vshll.u32 %v750, 30
    %v752 = vsub.s32 %v748, %v751
    %vm753 = vcmp.lt.s32.totalorder %v752, 0
    %v754 = vsub.s32 0, %v752
    %v755 = vsel %vm753, %v754, %v752
    %v756 = vclz %v755
    %v757 = vsub.s32 %v756, 2
    %vm758 = vcmp.gt.s32.totalorder 0, %v757
    %v759 = vsel %vm758, 0, %v757
    %v760 = vsub.s32 32, %v759
    %v761 = vshll.u32 %v752, %v759
    %v762 = vshrl.u32 %v744, %v760
    %v763 = vor.u32 %v761, %v762
    %v764 = vsub.s32 4294967266, %v759
    %v765 = vadd.s32 %v764, 127
    %v766 = vshll.u32 %v765, 23
    %v767 = vor.u32 4788187, %v766
    %v768 = vand.u32 2147483647, %v767
    %v770 = vcvt.s32.f32 %v763
    %v771 = vmul.f32 %v770, %v768
    %v772 = vxor.u32 %v771, 2147483648
    %v773 = vsel %vm690, %v772, %v771
    %v774 = vsub.s32 4, %v750
    %v775 = vsel %vm690, %v774, %v750
    %v776 = vsel %vm689, %v46, %v773
    %v777 = vsel %vm689, 0, %v775
    %v778 = vcosq.f32.pop %v776
    %v779 = vsinq.f32.pop %v776
    %vm780 = vweird.f32 %v46
    %v781 = vadd.s32 %v777, 3
    %v782 = vand.u32 %v781, 3
    %vm783 = vcmp.lt.s32.totalorder %v782, 2
    %vm784 = vcmp.eq.s32.totalorder %v782, 0
    %v785 = vxor.u32 %v779, 2147483648
    %v786 = vsel %vm784, %v778, %v785
    %vm787 = vcmp.eq.s32.totalorder %v782, 2
    %v788 = vxor.u32 %v778, 2147483648
    %v789 = vsel %vm787, %v788, %v779
    %v790 = vsel %vm783, %v786, %v789
    %v791 = vsel %vm780, nan, %v790
    %v792 = vand.u32 2147483647, %v47
    %vm793 = vcmp.le.f32.partialorder %v792, 0.7853982
    %vm794 = vcmp.lt.s32.totalorder %v47, 0
    %v795 = vand.u32 %v47, 2139095040
    %v796 = vshrl.u32 %v795, 23
    %v797 = vsub.s32 %v796, 127
    %v798 = vand.u32 2147483647, %v47
    %v799 = vand.u32 %v798, 8388607
    %v800 = vor.u32 %v799, 8388608
    %v801 = vsub.s32 0, %v800
    %v802 = vadd.s32 %v797, 1
    %vm803 = vcmp.gt.s32.totalorder %v802, 0
    %v804 = vsel %vm803, %v802, 0
    %v805 = vshrl.u32 %v804, 5
    %v806 = vand.u32 %v804, 31
    %v807 = vsub.s32 32, %v806
    %v808 = vshrl.u32 683565275, %v807
    %v809 = vshll.u32 683565275, %v806
    %v810 = vshrl.u32 2475754826, %v807
    %v811 = vor.u32 %v809, %v810
    %v812 = vshll.u32 2475754826, %v806
    %v813 = vshrl.u32 2131351028, %v807
    %v814 = vor.u32 %v812, %v813
    %v815 = vshll.u32 2131351028, %v806
    %v816 = vshrl.u32 2102212464, %v807
    %v817 = vor.u32 %v815, %v816
    %v818 = vshll.u32 2102212464, %v806
    %v819 = vshrl.u32 920167782, %v807
    %v820 = vor.u32 %v818, %v819
    %v821 = vshll.u32 920167782, %v806
    %v822 = vshrl.u32 1326507024, %v807
    %v823 = vor.u32 %v821, %v822
    %vm824 = vcmp.lt.s32.totalorder %v805, 1
    %vm825 = vcmp.lt.s32.totalorder %v805, 2
    %vm826 = vcmp.lt.s32.totalorder %v805, 3
    %vm827 = vcmp.lt.s32.totalorder %v805, 4
    %v828 = vsel %vm824, %v808, %v811
    %v829 = vsel %vm827, %v817, 2102212464
    %v830 = vsel %vm826, %v814, %v829
    %v831 = vsel %vm825, %v828, %v830
    %v832 = vsel %vm824, %v811, %v814
    %v833 = vsel %vm827, %v820, 920167782
    %v834 = vsel %vm826, %v817, %v833
    %v835 = vsel %vm825, %v832, %v834
    %v836 = vsel %vm824, %v814, %v817
    %v837 = vsel %vm827, %v823, 1326507024
    %v838 = vsel %vm826, %v820, %v837
    %v839 = vsel %vm825, %v836, %v838
    %v840 = vshll.u32 %v800, 8
    %v841 = vmul.u32.u64.compose %v840, %v839
    %v842 = vextract.low.u32 %v841
    %v843 = vextract.high.u32 %v841
    %v844 = vmul.u32.u64.compose %v840, %v835
    %v845 = vextract.low.u32 %v844
    %v846 = vextract.high.u32 %v844
    %v847 = vmul.u32 %v840, %v831
    %v848 = vadd.s32 %v843, %v845
    %vm849 = vc.u32 %v843, %v845
    %v850 = vadd.s32 %v846, 1
    %v851 = vsel %vm849, %v850, %v846
    %v852 = vadd.s32 %v847, %v851
    %v853 = vadd.s32 %v852, 536870912
    %v854 = vshrl.u32 %v853, 30
    %v855 = vshll.u32 %v854, 30
    %v856 = vsub.s32 %v852, %v855
    %vm857 = vcmp.lt.s32.totalorder %v856, 0
    %v858 = vsub.s32 0, %v856
    %v859 = vsel %vm857, %v858, %v856
    %v860 = vclz %v859
    %v861 = vsub.s32 %v860, 2
    %vm862 = vcmp.gt.s32.totalorder 0, %v861
    %v863 = vsel %vm862, 0, %v861
    %v864 = vsub.s32 32, %v863
    %v865 = vshll.u32 %v856, %v863
    %v866 = vshrl.u32 %v848, %v864
    %v867 = vor.u32 %v865, %v866
    %v868 = vsub.s32 4294967266, %v863
    %v869 = vadd.s32 %v868, 127
    %v870 = vshll.u32 %v869, 23
    %v871 = vor.u32 4788187, %v870
    %v872 = vand.u32 2147483647, %v871
    %v874 = vcvt.s32.f32 %v867
    %v875 = vmul.f32 %v874, %v872
    %v876 = vxor.u32 %v875, 2147483648
    %v877 = vsel %vm794, %v876, %v875
    %v878 = vsub.s32 4, %v854
    %v879 = vsel %vm794, %v878, %v854
    %v880 = vsel %vm793, %v47, %v877
    %v881 = vsel %vm793, 0, %v879
    %v882 = vcosq.f32.pop %v880
    %v883 = vsinq.f32.pop %v880
    %vm884 = vweird.f32 %v47
    %v885 = vadd.s32 %v881, 3
    %v886 = vand.u32 %v885, 3
    %vm887 = vcmp.lt.s32.totalorder %v886, 2
    %vm888 = vcmp.eq.s32.totalorder %v886, 0
    %v889 = vxor.u32 %v883, 2147483648
    %v890 = vsel %vm888, %v882, %v889
    %vm891 = vcmp.eq.s32.totalorder %v886, 2
    %v892 = vxor.u32 %v882, 2147483648
    %v893 = vsel %vm891, %v892, %v883
    %v894 = vsel %vm887, %v890, %v893
    %v895 = vsel %vm884, nan, %v894
    %v896 = vmul.f32 %v56, %v167
    %v897 = vmul.f32 %v57, %v271
    %v898 = vmul.f32 %v58, %v375
    %v899 = vmul.f32 %v59, %v479
    %v900 = vmul.f32 %v60, %v583
    %v901 = vmul.f32 %v61, %v687
    %v902 = vmul.f32 %v62, %v791
    %v903 = vmul.f32 %v63, %v895
    %v904 = vmul.f32 %v48, 1.442695
    %v905 = vpow.pop %v904
    %v906 = vmul.f32 %v49, 1.442695
    %v907 = vpow.pop %v906
    %v908 = vmul.f32 %v50, 1.442695
    %v909 = vpow.pop %v908
    %v910 = vmul.f32 %v51, 1.442695
    %v911 = vpow.pop %v910
    %v912 = vmul.f32 %v52, 1.442695
    %v913 = vpow.pop %v912
    %v914 = vmul.f32 %v53, 1.442695
    %v915 = vpow.pop %v914
    %v916 = vmul.f32 %v54, 1.442695
    %v917 = vpow.pop %v916
    %v918 = vmul.f32 %v55, 1.442695
    %v919 = vpow.pop %v918
    %v920 = vand.u32 2147483647, %v40
    %vm921 = vcmp.le.f32.partialorder %v920, 0.7853982
    %vm922 = vcmp.lt.s32.totalorder %v40, 0
    %v923 = vand.u32 %v40, 2139095040
    %v924 = vshrl.u32 %v923, 23
    %v925 = vsub.s32 %v924, 127
    %v926 = vand.u32 2147483647, %v40
    %v927 = vand.u32 %v926, 8388607
    %v928 = vor.u32 %v927, 8388608
    %v929 = vsub.s32 0, %v928
    %v930 = vadd.s32 %v925, 1
    %vm931 = vcmp.gt.s32.totalorder %v930, 0
    %v932 = vsel %vm931, %v930, 0
    %v933 = vshrl.u32 %v932, 5
    %v934 = vand.u32 %v932, 31
    %v935 = vsub.s32 32, %v934
    %v936 = vshrl.u32 683565275, %v935
    %v937 = vshll.u32 683565275, %v934
    %v938 = vshrl.u32 2475754826, %v935
    %v939 = vor.u32 %v937, %v938
    %v940 = vshll.u32 2475754826, %v934
    %v941 = vshrl.u32 2131351028, %v935
    %v942 = vor.u32 %v940, %v941
    %v943 = vshll.u32 2131351028, %v934
    %v944 = vshrl.u32 2102212464, %v935
    %v945 = vor.u32 %v943, %v944
    %v946 = vshll.u32 2102212464, %v934
    %v947 = vshrl.u32 920167782, %v935
    %v948 = vor.u32 %v946, %v947
    %v949 = vshll.u32 920167782, %v934
    %v950 = vshrl.u32 1326507024, %v935
    %v951 = vor.u32 %v949, %v950
    %vm952 = vcmp.lt.s32.totalorder %v933, 1
    %vm953 = vcmp.lt.s32.totalorder %v933, 2
    %vm954 = vcmp.lt.s32.totalorder %v933, 3
    %vm955 = vcmp.lt.s32.totalorder %v933, 4
    %v956 = vsel %vm952, %v936, %v939
    %v957 = vsel %vm955, %v945, 2102212464
    %v958 = vsel %vm954, %v942, %v957
    %v959 = vsel %vm953, %v956, %v958
    %v960 = vsel %vm952, %v939, %v942
    %v961 = vsel %vm955, %v948, 920167782
    %v962 = vsel %vm954, %v945, %v961
    %v963 = vsel %vm953, %v960, %v962
    %v964 = vsel %vm952, %v942, %v945
    %v965 = vsel %vm955, %v951, 1326507024
    %v966 = vsel %vm954, %v948, %v965
    %v967 = vsel %vm953, %v964, %v966
    %v968 = vshll.u32 %v928, 8
    %v969 = vmul.u32.u64.compose %v968, %v967
    %v970 = vextract.low.u32 %v969
    %v971 = vextract.high.u32 %v969
    %v972 = vmul.u32.u64.compose %v968, %v963
    %v973 = vextract.low.u32 %v972
    %v974 = vextract.high.u32 %v972
    %v975 = vmul.u32 %v968, %v959
    %v976 = vadd.s32 %v971, %v973
    %vm977 = vc.u32 %v971, %v973
    %v978 = vadd.s32 %v974, 1
    %v979 = vsel %vm977, %v978, %v974
    %v980 = vadd.s32 %v975, %v979
    %v981 = vadd.s32 %v980, 536870912
    %v982 = vshrl.u32 %v981, 30
    %v983 = vshll.u32 %v982, 30
    %v984 = vsub.s32 %v980, %v983
    %vm985 = vcmp.lt.s32.totalorder %v984, 0
    %v986 = vsub.s32 0, %v984
    %v987 = vsel %vm985, %v986, %v984
    %v988 = vclz %v987
    %v989 = vsub.s32 %v988, 2
    %vm990 = vcmp.gt.s32.totalorder 0, %v989
    %v991 = vsel %vm990, 0, %v989
    %v992 = vsub.s32 32, %v991
    %v993 = vshll.u32 %v984, %v991
    %v994 = vshrl.u32 %v976, %v992
    %v995 = vor.u32 %v993, %v994
    %v996 = vsub.s32 4294967266, %v991
    %v997 = vadd.s32 %v996, 127
    %v998 = vshll.u32 %v997, 23
    %v999 = vor.u32 4788187, %v998
    %v1000 = vand.u32 2147483647, %v999
    %v1002 = vcvt.s32.f32 %v995
    %v1003 = vmul.f32 %v1002, %v1000
    %v1004 = vxor.u32 %v1003, 2147483648
    %v1005 = vsel %vm922, %v1004, %v1003
    %v1006 = vsub.s32 4, %v982
    %v1007 = vsel %vm922, %v1006, %v982
    %v1008 = vsel %vm921, %v40, %v1005
    %v1009 = vsel %vm921, 0, %v1007
    %v1010 = vcosq.f32.pop %v1008
    %v1011 = vsinq.f32.pop %v1008
    %vm1012 = vweird.f32 %v40
    %v1013 = vand.u32 %v1009, 3
    %vm1014 = vcmp.lt.s32.totalorder %v1013, 2
    %vm1015 = vcmp.eq.s32.totalorder %v1013, 0
    %v1016 = vxor.u32 %v1011, 2147483648
    %v1017 = vsel %vm1015, %v1010, %v1016
    %vm1018 = vcmp.eq.s32.totalorder %v1013, 2
    %v1019 = vxor.u32 %v1010, 2147483648
    %v1020 = vsel %vm1018, %v1019, %v1011
    %v1021 = vsel %vm1014, %v1017, %v1020
    %v1022 = vsel %vm1012, nan, %v1021
    %v1023 = vand.u32 2147483647, %v41
    %vm1024 = vcmp.le.f32.partialorder %v1023, 0.7853982
    %vm1025 = vcmp.lt.s32.totalorder %v41, 0
    %v1026 = vand.u32 %v41, 2139095040
    %v1027 = vshrl.u32 %v1026, 23
    %v1028 = vsub.s32 %v1027, 127
    %v1029 = vand.u32 2147483647, %v41
    %v1030 = vand.u32 %v1029, 8388607
    %v1031 = vor.u32 %v1030, 8388608
    %v1032 = vsub.s32 0, %v1031
    %v1033 = vadd.s32 %v1028, 1
    %vm1034 = vcmp.gt.s32.totalorder %v1033, 0
    %v1035 = vsel %vm1034, %v1033, 0
    %v1036 = vshrl.u32 %v1035, 5
    %v1037 = vand.u32 %v1035, 31
    %v1038 = vsub.s32 32, %v1037
    %v1039 = vshrl.u32 683565275, %v1038
    %v1040 = vshll.u32 683565275, %v1037
    %v1041 = vshrl.u32 2475754826, %v1038
    %v1042 = vor.u32 %v1040, %v1041
    %v1043 = vshll.u32 2475754826, %v1037
    %v1044 = vshrl.u32 2131351028, %v1038
    %v1045 = vor.u32 %v1043, %v1044
    %v1046 = vshll.u32 2131351028, %v1037
    %v1047 = vshrl.u32 2102212464, %v1038
    %v1048 = vor.u32 %v1046, %v1047
    %v1049 = vshll.u32 2102212464, %v1037
    %v1050 = vshrl.u32 920167782, %v1038
    %v1051 = vor.u32 %v1049, %v1050
    %v1052 = vshll.u32 920167782, %v1037
    %v1053 = vshrl.u32 1326507024, %v1038
    %v1054 = vor.u32 %v1052, %v1053
    %vm1055 = vcmp.lt.s32.totalorder %v1036, 1
    %vm1056 = vcmp.lt.s32.totalorder %v1036, 2
    %vm1057 = vcmp.lt.s32.totalorder %v1036, 3
    %vm1058 = vcmp.lt.s32.totalorder %v1036, 4
    %v1059 = vsel %vm1055, %v1039, %v1042
    %v1060 = vsel %vm1058, %v1048, 2102212464
    %v1061 = vsel %vm1057, %v1045, %v1060
    %v1062 = vsel %vm1056, %v1059, %v1061
    %v1063 = vsel %vm1055, %v1042, %v1045
    %v1064 = vsel %vm1058, %v1051, 920167782
    %v1065 = vsel %vm1057, %v1048, %v1064
    %v1066 = vsel %vm1056, %v1063, %v1065
    %v1067 = vsel %vm1055, %v1045, %v1048
    %v1068 = vsel %vm1058, %v1054, 1326507024
    %v1069 = vsel %vm1057, %v1051, %v1068
    %v1070 = vsel %vm1056, %v1067, %v1069
    %v1071 = vshll.u32 %v1031, 8
    %v1072 = vmul.u32.u64.compose %v1071, %v1070
    %v1073 = vextract.low.u32 %v1072
    %v1074 = vextract.high.u32 %v1072
    %v1075 = vmul.u32.u64.compose %v1071, %v1066
    %v1076 = vextract.low.u32 %v1075
    %v1077 = vextract.high.u32 %v1075
    %v1078 = vmul.u32 %v1071, %v1062
    %v1079 = vadd.s32 %v1074, %v1076
    %vm1080 = vc.u32 %v1074, %v1076
    %v1081 = vadd.s32 %v1077, 1
    %v1082 = vsel %vm1080, %v1081, %v1077
    %v1083 = vadd.s32 %v1078, %v1082
    %v1084 = vadd.s32 %v1083, 536870912
    %v1085 = vshrl.u32 %v1084, 30
    %v1086 = vshll.u32 %v1085, 30
    %v1087 = vsub.s32 %v1083, %v1086
    %vm1088 = vcmp.lt.s32.totalorder %v1087, 0
    %v1089 = vsub.s32 0, %v1087
    %v1090 = vsel %vm1088, %v1089, %v1087
    %v1091 = vclz %v1090
    %v1092 = vsub.s32 %v1091, 2
    %vm1093 = vcmp.gt.s32.totalorder 0, %v1092
    %v1094 = vsel %vm1093, 0, %v1092
    %v1095 = vsub.s32 32, %v1094
    %v1096 = vshll.u32 %v1087, %v1094
    %v1097 = vshrl.u32 %v1079, %v1095
    %v1098 = vor.u32 %v1096, %v1097
    %v1099 = vsub.s32 4294967266, %v1094
    %v1100 = vadd.s32 %v1099, 127
    %v1101 = vshll.u32 %v1100, 23
    %v1102 = vor.u32 4788187, %v1101
    %v1103 = vand.u32 2147483647, %v1102
    %v1105 = vcvt.s32.f32 %v1098
    %v1106 = vmul.f32 %v1105, %v1103
    %v1107 = vxor.u32 %v1106, 2147483648
    %v1108 = vsel %vm1025, %v1107, %v1106
    %v1109 = vsub.s32 4, %v1085
    %v1110 = vsel %vm1025, %v1109, %v1085
    %v1111 = vsel %vm1024, %v41, %v1108
    %v1112 = vsel %vm1024, 0, %v1110
    %v1113 = vcosq.f32.pop %v1111
    %v1114 = vsinq.f32.pop %v1111
    %vm1115 = vweird.f32 %v41
    %v1116 = vand.u32 %v1112, 3
    %vm1117 = vcmp.lt.s32.totalorder %v1116, 2
    %vm1118 = vcmp.eq.s32.totalorder %v1116, 0
    %v1119 = vxor.u32 %v1114, 2147483648
    %v1120 = vsel %vm1118, %v1113, %v1119
    %vm1121 = vcmp.eq.s32.totalorder %v1116, 2
    %v1122 = vxor.u32 %v1113, 2147483648
    %v1123 = vsel %vm1121, %v1122, %v1114
    %v1124 = vsel %vm1117, %v1120, %v1123
    %v1125 = vsel %vm1115, nan, %v1124
    %v1126 = vand.u32 2147483647, %v42
    %vm1127 = vcmp.le.f32.partialorder %v1126, 0.7853982
    %vm1128 = vcmp.lt.s32.totalorder %v42, 0
    %v1129 = vand.u32 %v42, 2139095040
    %v1130 = vshrl.u32 %v1129, 23
    %v1131 = vsub.s32 %v1130, 127
    %v1132 = vand.u32 2147483647, %v42
    %v1133 = vand.u32 %v1132, 8388607
    %v1134 = vor.u32 %v1133, 8388608
    %v1135 = vsub.s32 0, %v1134
    %v1136 = vadd.s32 %v1131, 1
    %vm1137 = vcmp.gt.s32.totalorder %v1136, 0
    %v1138 = vsel %vm1137, %v1136, 0
    %v1139 = vshrl.u32 %v1138, 5
    %v1140 = vand.u32 %v1138, 31
    %v1141 = vsub.s32 32, %v1140
    %v1142 = vshrl.u32 683565275, %v1141
    %v1143 = vshll.u32 683565275, %v1140
    %v1144 = vshrl.u32 2475754826, %v1141
    %v1145 = vor.u32 %v1143, %v1144
    %v1146 = vshll.u32 2475754826, %v1140
    %v1147 = vshrl.u32 2131351028, %v1141
    %v1148 = vor.u32 %v1146, %v1147
    %v1149 = vshll.u32 2131351028, %v1140
    %v1150 = vshrl.u32 2102212464, %v1141
    %v1151 = vor.u32 %v1149, %v1150
    %v1152 = vshll.u32 2102212464, %v1140
    %v1153 = vshrl.u32 920167782, %v1141
    %v1154 = vor.u32 %v1152, %v1153
    %v1155 = vshll.u32 920167782, %v1140
    %v1156 = vshrl.u32 1326507024, %v1141
    %v1157 = vor.u32 %v1155, %v1156
    %vm1158 = vcmp.lt.s32.totalorder %v1139, 1
    %vm1159 = vcmp.lt.s32.totalorder %v1139, 2
    %vm1160 = vcmp.lt.s32.totalorder %v1139, 3
    %vm1161 = vcmp.lt.s32.totalorder %v1139, 4
    %v1162 = vsel %vm1158, %v1142, %v1145
    %v1163 = vsel %vm1161, %v1151, 2102212464
    %v1164 = vsel %vm1160, %v1148, %v1163
    %v1165 = vsel %vm1159, %v1162, %v1164
    %v1166 = vsel %vm1158, %v1145, %v1148
    %v1167 = vsel %vm1161, %v1154, 920167782
    %v1168 = vsel %vm1160, %v1151, %v1167
    %v1169 = vsel %vm1159, %v1166, %v1168
    %v1170 = vsel %vm1158, %v1148, %v1151
    %v1171 = vsel %vm1161, %v1157, 1326507024
    %v1172 = vsel %vm1160, %v1154, %v1171
    %v1173 = vsel %vm1159, %v1170, %v1172
    %v1174 = vshll.u32 %v1134, 8
    %v1175 = vmul.u32.u64.compose %v1174, %v1173
    %v1176 = vextract.low.u32 %v1175
    %v1177 = vextract.high.u32 %v1175
    %v1178 = vmul.u32.u64.compose %v1174, %v1169
    %v1179 = vextract.low.u32 %v1178
    %v1180 = vextract.high.u32 %v1178
    %v1181 = vmul.u32 %v1174, %v1165
    %v1182 = vadd.s32 %v1177, %v1179
    %vm1183 = vc.u32 %v1177, %v1179
    %v1184 = vadd.s32 %v1180, 1
    %v1185 = vsel %vm1183, %v1184, %v1180
    %v1186 = vadd.s32 %v1181, %v1185
    %v1187 = vadd.s32 %v1186, 536870912
    %v1188 = vshrl.u32 %v1187, 30
    %v1189 = vshll.u32 %v1188, 30
    %v1190 = vsub.s32 %v1186, %v1189
    %vm1191 = vcmp.lt.s32.totalorder %v1190, 0
    %v1192 = vsub.s32 0, %v1190
    %v1193 = vsel %vm1191, %v1192, %v1190
    %v1194 = vclz %v1193
    %v1195 = vsub.s32 %v1194, 2
    %vm1196 = vcmp.gt.s32.totalorder 0, %v1195
    %v1197 = vsel %vm1196, 0, %v1195
    %v1198 = vsub.s32 32, %v1197
    %v1199 = vshll.u32 %v1190, %v1197
    %v1200 = vshrl.u32 %v1182, %v1198
    %v1201 = vor.u32 %v1199, %v1200
    %v1202 = vsub.s32 4294967266, %v1197
    %v1203 = vadd.s32 %v1202, 127
    %v1204 = vshll.u32 %v1203, 23
    %v1205 = vor.u32 4788187, %v1204
    %v1206 = vand.u32 2147483647, %v1205
    %v1208 = vcvt.s32.f32 %v1201
    %v1209 = vmul.f32 %v1208, %v1206
    %v1210 = vxor.u32 %v1209, 2147483648
    %v1211 = vsel %vm1128, %v1210, %v1209
    %v1212 = vsub.s32 4, %v1188
    %v1213 = vsel %vm1128, %v1212, %v1188
    %v1214 = vsel %vm1127, %v42, %v1211
    %v1215 = vsel %vm1127, 0, %v1213
    %v1216 = vcosq.f32.pop %v1214
    %v1217 = vsinq.f32.pop %v1214
    %vm1218 = vweird.f32 %v42
    %v1219 = vand.u32 %v1215, 3
    %vm1220 = vcmp.lt.s32.totalorder %v1219, 2
    %vm1221 = vcmp.eq.s32.totalorder %v1219, 0
    %v1222 = vxor.u32 %v1217, 2147483648
    %v1223 = vsel %vm1221, %v1216, %v1222
    %vm1224 = vcmp.eq.s32.totalorder %v1219, 2
    %v1225 = vxor.u32 %v1216, 2147483648
    %v1226 = vsel %vm1224, %v1225, %v1217
    %v1227 = vsel %vm1220, %v1223, %v1226
    %v1228 = vsel %vm1218, nan, %v1227
    %v1229 = vand.u32 2147483647, %v43
    %vm1230 = vcmp.le.f32.partialorder %v1229, 0.7853982
    %vm1231 = vcmp.lt.s32.totalorder %v43, 0
    %v1232 = vand.u32 %v43, 2139095040
    %v1233 = vshrl.u32 %v1232, 23
    %v1234 = vsub.s32 %v1233, 127
    %v1235 = vand.u32 2147483647, %v43
    %v1236 = vand.u32 %v1235, 8388607
    %v1237 = vor.u32 %v1236, 8388608
    %v1238 = vsub.s32 0, %v1237
    %v1239 = vadd.s32 %v1234, 1
    %vm1240 = vcmp.gt.s32.totalorder %v1239, 0
    %v1241 = vsel %vm1240, %v1239, 0
    %v1242 = vshrl.u32 %v1241, 5
    %v1243 = vand.u32 %v1241, 31
    %v1244 = vsub.s32 32, %v1243
    %v1245 = vshrl.u32 683565275, %v1244
    %v1246 = vshll.u32 683565275, %v1243
    %v1247 = vshrl.u32 2475754826, %v1244
    %v1248 = vor.u32 %v1246, %v1247
    %v1249 = vshll.u32 2475754826, %v1243
    %v1250 = vshrl.u32 2131351028, %v1244
    %v1251 = vor.u32 %v1249, %v1250
    %v1252 = vshll.u32 2131351028, %v1243
    %v1253 = vshrl.u32 2102212464, %v1244
    %v1254 = vor.u32 %v1252, %v1253
    %v1255 = vshll.u32 2102212464, %v1243
    %v1256 = vshrl.u32 920167782, %v1244
    %v1257 = vor.u32 %v1255, %v1256
    %v1258 = vshll.u32 920167782, %v1243
    %v1259 = vshrl.u32 1326507024, %v1244
    %v1260 = vor.u32 %v1258, %v1259
    %vm1261 = vcmp.lt.s32.totalorder %v1242, 1
    %vm1262 = vcmp.lt.s32.totalorder %v1242, 2
    %vm1263 = vcmp.lt.s32.totalorder %v1242, 3
    %vm1264 = vcmp.lt.s32.totalorder %v1242, 4
    %v1265 = vsel %vm1261, %v1245, %v1248
    %v1266 = vsel %vm1264, %v1254, 2102212464
    %v1267 = vsel %vm1263, %v1251, %v1266
    %v1268 = vsel %vm1262, %v1265, %v1267
    %v1269 = vsel %vm1261, %v1248, %v1251
    %v1270 = vsel %vm1264, %v1257, 920167782
    %v1271 = vsel %vm1263, %v1254, %v1270
    %v1272 = vsel %vm1262, %v1269, %v1271
    %v1273 = vsel %vm1261, %v1251, %v1254
    %v1274 = vsel %vm1264, %v1260, 1326507024
    %v1275 = vsel %vm1263, %v1257, %v1274
    %v1276 = vsel %vm1262, %v1273, %v1275
    %v1277 = vshll.u32 %v1237, 8
    %v1278 = vmul.u32.u64.compose %v1277, %v1276
    %v1279 = vextract.low.u32 %v1278
    %v1280 = vextract.high.u32 %v1278
    %v1281 = vmul.u32.u64.compose %v1277, %v1272
    %v1282 = vextract.low.u32 %v1281
    %v1283 = vextract.high.u32 %v1281
    %v1284 = vmul.u32 %v1277, %v1268
    %v1285 = vadd.s32 %v1280, %v1282
    %vm1286 = vc.u32 %v1280, %v1282
    %v1287 = vadd.s32 %v1283, 1
    %v1288 = vsel %vm1286, %v1287, %v1283
    %v1289 = vadd.s32 %v1284, %v1288
    %v1290 = vadd.s32 %v1289, 536870912
    %v1291 = vshrl.u32 %v1290, 30
    %v1292 = vshll.u32 %v1291, 30
    %v1293 = vsub.s32 %v1289, %v1292
    %vm1294 = vcmp.lt.s32.totalorder %v1293, 0
    %v1295 = vsub.s32 0, %v1293
    %v1296 = vsel %vm1294, %v1295, %v1293
    %v1297 = vclz %v1296
    %v1298 = vsub.s32 %v1297, 2
    %vm1299 = vcmp.gt.s32.totalorder 0, %v1298
    %v1300 = vsel %vm1299, 0, %v1298
    %v1301 = vsub.s32 32, %v1300
    %v1302 = vshll.u32 %v1293, %v1300
    %v1303 = vshrl.u32 %v1285, %v1301
    %v1304 = vor.u32 %v1302, %v1303
    %v1305 = vsub.s32 4294967266, %v1300
    %v1306 = vadd.s32 %v1305, 127
    %v1307 = vshll.u32 %v1306, 23
    %v1308 = vor.u32 4788187, %v1307
    %v1309 = vand.u32 2147483647, %v1308
    %v1311 = vcvt.s32.f32 %v1304
    %v1312 = vmul.f32 %v1311, %v1309
    %v1313 = vxor.u32 %v1312, 2147483648
    %v1314 = vsel %vm1231, %v1313, %v1312
    %v1315 = vsub.s32 4, %v1291
    %v1316 = vsel %vm1231, %v1315, %v1291
    %v1317 = vsel %vm1230, %v43, %v1314
    %v1318 = vsel %vm1230, 0, %v1316
    %v1319 = vcosq.f32.pop %v1317
    %v1320 = vsinq.f32.pop %v1317
    %vm1321 = vweird.f32 %v43
    %v1322 = vand.u32 %v1318, 3
    %vm1323 = vcmp.lt.s32.totalorder %v1322, 2
    %vm1324 = vcmp.eq.s32.totalorder %v1322, 0
    %v1325 = vxor.u32 %v1320, 2147483648
    %v1326 = vsel %vm1324, %v1319, %v1325
    %vm1327 = vcmp.eq.s32.totalorder %v1322, 2
    %v1328 = vxor.u32 %v1319, 2147483648
    %v1329 = vsel %vm1327, %v1328, %v1320
    %v1330 = vsel %vm1323, %v1326, %v1329
    %v1331 = vsel %vm1321, nan, %v1330
    %v1332 = vand.u32 2147483647, %v44
    %vm1333 = vcmp.le.f32.partialorder %v1332, 0.7853982
    %vm1334 = vcmp.lt.s32.totalorder %v44, 0
    %v1335 = vand.u32 %v44, 2139095040
    %v1336 = vshrl.u32 %v1335, 23
    %v1337 = vsub.s32 %v1336, 127
    %v1338 = vand.u32 2147483647, %v44
    %v1339 = vand.u32 %v1338, 8388607
    %v1340 = vor.u32 %v1339, 8388608
    %v1341 = vsub.s32 0, %v1340
    %v1342 = vadd.s32 %v1337, 1
    %vm1343 = vcmp.gt.s32.totalorder %v1342, 0
    %v1344 = vsel %vm1343, %v1342, 0
    %v1345 = vshrl.u32 %v1344, 5
    %v1346 = vand.u32 %v1344, 31
    %v1347 = vsub.s32 32, %v1346
    %v1348 = vshrl.u32 683565275, %v1347
    %v1349 = vshll.u32 683565275, %v1346
    %v1350 = vshrl.u32 2475754826, %v1347
    %v1351 = vor.u32 %v1349, %v1350
    %v1352 = vshll.u32 2475754826, %v1346
    %v1353 = vshrl.u32 2131351028, %v1347
    %v1354 = vor.u32 %v1352, %v1353
    %v1355 = vshll.u32 2131351028, %v1346
    %v1356 = vshrl.u32 2102212464, %v1347
    %v1357 = vor.u32 %v1355, %v1356
    %v1358 = vshll.u32 2102212464, %v1346
    %v1359 = vshrl.u32 920167782, %v1347
    %v1360 = vor.u32 %v1358, %v1359
    %v1361 = vshll.u32 920167782, %v1346
    %v1362 = vshrl.u32 1326507024, %v1347
    %v1363 = vor.u32 %v1361, %v1362
    %vm1364 = vcmp.lt.s32.totalorder %v1345, 1
    %vm1365 = vcmp.lt.s32.totalorder %v1345, 2
    %vm1366 = vcmp.lt.s32.totalorder %v1345, 3
    %vm1367 = vcmp.lt.s32.totalorder %v1345, 4
    %v1368 = vsel %vm1364, %v1348, %v1351
    %v1369 = vsel %vm1367, %v1357, 2102212464
    %v1370 = vsel %vm1366, %v1354, %v1369
    %v1371 = vsel %vm1365, %v1368, %v1370
    %v1372 = vsel %vm1364, %v1351, %v1354
    %v1373 = vsel %vm1367, %v1360, 920167782
    %v1374 = vsel %vm1366, %v1357, %v1373
    %v1375 = vsel %vm1365, %v1372, %v1374
    %v1376 = vsel %vm1364, %v1354, %v1357
    %v1377 = vsel %vm1367, %v1363, 1326507024
    %v1378 = vsel %vm1366, %v1360, %v1377
    %v1379 = vsel %vm1365, %v1376, %v1378
    %v1380 = vshll.u32 %v1340, 8
    %v1381 = vmul.u32.u64.compose %v1380, %v1379
    %v1382 = vextract.low.u32 %v1381
    %v1383 = vextract.high.u32 %v1381
    %v1384 = vmul.u32.u64.compose %v1380, %v1375
    %v1385 = vextract.low.u32 %v1384
    %v1386 = vextract.high.u32 %v1384
    %v1387 = vmul.u32 %v1380, %v1371
    %v1388 = vadd.s32 %v1383, %v1385
    %vm1389 = vc.u32 %v1383, %v1385
    %v1390 = vadd.s32 %v1386, 1
    %v1391 = vsel %vm1389, %v1390, %v1386
    %v1392 = vadd.s32 %v1387, %v1391
    %v1393 = vadd.s32 %v1392, 536870912
    %v1394 = vshrl.u32 %v1393, 30
    %v1395 = vshll.u32 %v1394, 30
    %v1396 = vsub.s32 %v1392, %v1395
    %vm1397 = vcmp.lt.s32.totalorder %v1396, 0
    %v1398 = vsub.s32 0, %v1396
    %v1399 = vsel %vm1397, %v1398, %v1396
    %v1400 = vclz %v1399
    %v1401 = vsub.s32 %v1400, 2
    %vm1402 = vcmp.gt.s32.totalorder 0, %v1401
    %v1403 = vsel %vm1402, 0, %v1401
    %v1404 = vsub.s32 32, %v1403
    %v1405 = vshll.u32 %v1396, %v1403
    %v1406 = vshrl.u32 %v1388, %v1404
    %v1407 = vor.u32 %v1405, %v1406
    %v1408 = vsub.s32 4294967266, %v1403
    %v1409 = vadd.s32 %v1408, 127
    %v1410 = vshll.u32 %v1409, 23
    %v1411 = vor.u32 4788187, %v1410
    %v1412 = vand.u32 2147483647, %v1411
    %v1414 = vcvt.s32.f32 %v1407
    %v1415 = vmul.f32 %v1414, %v1412
    %v1416 = vxor.u32 %v1415, 2147483648
    %v1417 = vsel %vm1334, %v1416, %v1415
    %v1418 = vsub.s32 4, %v1394
    %v1419 = vsel %vm1334, %v1418, %v1394
    %v1420 = vsel %vm1333, %v44, %v1417
    %v1421 = vsel %vm1333, 0, %v1419
    %v1422 = vcosq.f32.pop %v1420
    %v1423 = vsinq.f32.pop %v1420
    %vm1424 = vweird.f32 %v44
    %v1425 = vand.u32 %v1421, 3
    %vm1426 = vcmp.lt.s32.totalorder %v1425, 2
    %vm1427 = vcmp.eq.s32.totalorder %v1425, 0
    %v1428 = vxor.u32 %v1423, 2147483648
    %v1429 = vsel %vm1427, %v1422, %v1428
    %vm1430 = vcmp.eq.s32.totalorder %v1425, 2
    %v1431 = vxor.u32 %v1422, 2147483648
    %v1432 = vsel %vm1430, %v1431, %v1423
    %v1433 = vsel %vm1426, %v1429, %v1432
    %v1434 = vsel %vm1424, nan, %v1433
    %v1435 = vand.u32 2147483647, %v45
    %vm1436 = vcmp.le.f32.partialorder %v1435, 0.7853982
    %vm1437 = vcmp.lt.s32.totalorder %v45, 0
    %v1438 = vand.u32 %v45, 2139095040
    %v1439 = vshrl.u32 %v1438, 23
    %v1440 = vsub.s32 %v1439, 127
    %v1441 = vand.u32 2147483647, %v45
    %v1442 = vand.u32 %v1441, 8388607
    %v1443 = vor.u32 %v1442, 8388608
    %v1444 = vsub.s32 0, %v1443
    %v1445 = vadd.s32 %v1440, 1
    %vm1446 = vcmp.gt.s32.totalorder %v1445, 0
    %v1447 = vsel %vm1446, %v1445, 0
    %v1448 = vshrl.u32 %v1447, 5
    %v1449 = vand.u32 %v1447, 31
    %v1450 = vsub.s32 32, %v1449
    %v1451 = vshrl.u32 683565275, %v1450
    %v1452 = vshll.u32 683565275, %v1449
    %v1453 = vshrl.u32 2475754826, %v1450
    %v1454 = vor.u32 %v1452, %v1453
    %v1455 = vshll.u32 2475754826, %v1449
    %v1456 = vshrl.u32 2131351028, %v1450
    %v1457 = vor.u32 %v1455, %v1456
    %v1458 = vshll.u32 2131351028, %v1449
    %v1459 = vshrl.u32 2102212464, %v1450
    %v1460 = vor.u32 %v1458, %v1459
    %v1461 = vshll.u32 2102212464, %v1449
    %v1462 = vshrl.u32 920167782, %v1450
    %v1463 = vor.u32 %v1461, %v1462
    %v1464 = vshll.u32 920167782, %v1449
    %v1465 = vshrl.u32 1326507024, %v1450
    %v1466 = vor.u32 %v1464, %v1465
    %vm1467 = vcmp.lt.s32.totalorder %v1448, 1
    %vm1468 = vcmp.lt.s32.totalorder %v1448, 2
    %vm1469 = vcmp.lt.s32.totalorder %v1448, 3
    %vm1470 = vcmp.lt.s32.totalorder %v1448, 4
    %v1471 = vsel %vm1467, %v1451, %v1454
    %v1472 = vsel %vm1470, %v1460, 2102212464
    %v1473 = vsel %vm1469, %v1457, %v1472
    %v1474 = vsel %vm1468, %v1471, %v1473
    %v1475 = vsel %vm1467, %v1454, %v1457
    %v1476 = vsel %vm1470, %v1463, 920167782
    %v1477 = vsel %vm1469, %v1460, %v1476
    %v1478 = vsel %vm1468, %v1475, %v1477
    %v1479 = vsel %vm1467, %v1457, %v1460
    %v1480 = vsel %vm1470, %v1466, 1326507024
    %v1481 = vsel %vm1469, %v1463, %v1480
    %v1482 = vsel %vm1468, %v1479, %v1481
    %v1483 = vshll.u32 %v1443, 8
    %v1484 = vmul.u32.u64.compose %v1483, %v1482
    %v1485 = vextract.low.u32 %v1484
    %v1486 = vextract.high.u32 %v1484
    %v1487 = vmul.u32.u64.compose %v1483, %v1478
    %v1488 = vextract.low.u32 %v1487
    %v1489 = vextract.high.u32 %v1487
    %v1490 = vmul.u32 %v1483, %v1474
    %v1491 = vadd.s32 %v1486, %v1488
    %vm1492 = vc.u32 %v1486, %v1488
    %v1493 = vadd.s32 %v1489, 1
    %v1494 = vsel %vm1492, %v1493, %v1489
    %v1495 = vadd.s32 %v1490, %v1494
    %v1496 = vadd.s32 %v1495, 536870912
    %v1497 = vshrl.u32 %v1496, 30
    %v1498 = vshll.u32 %v1497, 30
    %v1499 = vsub.s32 %v1495, %v1498
    %vm1500 = vcmp.lt.s32.totalorder %v1499, 0
    %v1501 = vsub.s32 0, %v1499
    %v1502 = vsel %vm1500, %v1501, %v1499
    %v1503 = vclz %v1502
    %v1504 = vsub.s32 %v1503, 2
    %vm1505 = vcmp.gt.s32.totalorder 0, %v1504
    %v1506 = vsel %vm1505, 0, %v1504
    %v1507 = vsub.s32 32, %v1506
    %v1508 = vshll.u32 %v1499, %v1506
    %v1509 = vshrl.u32 %v1491, %v1507
    %v1510 = vor.u32 %v1508, %v1509
    %v1511 = vsub.s32 4294967266, %v1506
    %v1512 = vadd.s32 %v1511, 127
    %v1513 = vshll.u32 %v1512, 23
    %v1514 = vor.u32 4788187, %v1513
    %v1515 = vand.u32 2147483647, %v1514
    %v1517 = vcvt.s32.f32 %v1510
    %v1518 = vmul.f32 %v1517, %v1515
    %v1519 = vxor.u32 %v1518, 2147483648
    %v1520 = vsel %vm1437, %v1519, %v1518
    %v1521 = vsub.s32 4, %v1497
    %v1522 = vsel %vm1437, %v1521, %v1497
    %v1523 = vsel %vm1436, %v45, %v1520
    %v1524 = vsel %vm1436, 0, %v1522
    %v1525 = vcosq.f32.pop %v1523
    %v1526 = vsinq.f32.pop %v1523
    %vm1527 = vweird.f32 %v45
    %v1528 = vand.u32 %v1524, 3
    %vm1529 = vcmp.lt.s32.totalorder %v1528, 2
    %vm1530 = vcmp.eq.s32.totalorder %v1528, 0
    %v1531 = vxor.u32 %v1526, 2147483648
    %v1532 = vsel %vm1530, %v1525, %v1531
    %vm1533 = vcmp.eq.s32.totalorder %v1528, 2
    %v1534 = vxor.u32 %v1525, 2147483648
    %v1535 = vsel %vm1533, %v1534, %v1526
    %v1536 = vsel %vm1529, %v1532, %v1535
    %v1537 = vsel %vm1527, nan, %v1536
    %v1538 = vand.u32 2147483647, %v46
    %vm1539 = vcmp.le.f32.partialorder %v1538, 0.7853982
    %vm1540 = vcmp.lt.s32.totalorder %v46, 0
    %v1541 = vand.u32 %v46, 2139095040
    %v1542 = vshrl.u32 %v1541, 23
    %v1543 = vsub.s32 %v1542, 127
    %v1544 = vand.u32 2147483647, %v46
    %v1545 = vand.u32 %v1544, 8388607
    %v1546 = vor.u32 %v1545, 8388608
    %v1547 = vsub.s32 0, %v1546
    %v1548 = vadd.s32 %v1543, 1
    %vm1549 = vcmp.gt.s32.totalorder %v1548, 0
    %v1550 = vsel %vm1549, %v1548, 0
    %v1551 = vshrl.u32 %v1550, 5
    %v1552 = vand.u32 %v1550, 31
    %v1553 = vsub.s32 32, %v1552
    %v1554 = vshrl.u32 683565275, %v1553
    %v1555 = vshll.u32 683565275, %v1552
    %v1556 = vshrl.u32 2475754826, %v1553
    %v1557 = vor.u32 %v1555, %v1556
    %v1558 = vshll.u32 2475754826, %v1552
    %v1559 = vshrl.u32 2131351028, %v1553
    %v1560 = vor.u32 %v1558, %v1559
    %v1561 = vshll.u32 2131351028, %v1552
    %v1562 = vshrl.u32 2102212464, %v1553
    %v1563 = vor.u32 %v1561, %v1562
    %v1564 = vshll.u32 2102212464, %v1552
    %v1565 = vshrl.u32 920167782, %v1553
    %v1566 = vor.u32 %v1564, %v1565
    %v1567 = vshll.u32 920167782, %v1552
    %v1568 = vshrl.u32 1326507024, %v1553
    %v1569 = vor.u32 %v1567, %v1568
    %vm1570 = vcmp.lt.s32.totalorder %v1551, 1
    %vm1571 = vcmp.lt.s32.totalorder %v1551, 2
    %vm1572 = vcmp.lt.s32.totalorder %v1551, 3
    %vm1573 = vcmp.lt.s32.totalorder %v1551, 4
    %v1574 = vsel %vm1570, %v1554, %v1557
    %v1575 = vsel %vm1573, %v1563, 2102212464
    %v1576 = vsel %vm1572, %v1560, %v1575
    %v1577 = vsel %vm1571, %v1574, %v1576
    %v1578 = vsel %vm1570, %v1557, %v1560
    %v1579 = vsel %vm1573, %v1566, 920167782
    %v1580 = vsel %vm1572, %v1563, %v1579
    %v1581 = vsel %vm1571, %v1578, %v1580
    %v1582 = vsel %vm1570, %v1560, %v1563
    %v1583 = vsel %vm1573, %v1569, 1326507024
    %v1584 = vsel %vm1572, %v1566, %v1583
    %v1585 = vsel %vm1571, %v1582, %v1584
    %v1586 = vshll.u32 %v1546, 8
    %v1587 = vmul.u32.u64.compose %v1586, %v1585
    %v1588 = vextract.low.u32 %v1587
    %v1589 = vextract.high.u32 %v1587
    %v1590 = vmul.u32.u64.compose %v1586, %v1581
    %v1591 = vextract.low.u32 %v1590
    %v1592 = vextract.high.u32 %v1590
    %v1593 = vmul.u32 %v1586, %v1577
    %v1594 = vadd.s32 %v1589, %v1591
    %vm1595 = vc.u32 %v1589, %v1591
    %v1596 = vadd.s32 %v1592, 1
    %v1597 = vsel %vm1595, %v1596, %v1592
    %v1598 = vadd.s32 %v1593, %v1597
    %v1599 = vadd.s32 %v1598, 536870912
    %v1600 = vshrl.u32 %v1599, 30
    %v1601 = vshll.u32 %v1600, 30
    %v1602 = vsub.s32 %v1598, %v1601
    %vm1603 = vcmp.lt.s32.totalorder %v1602, 0
    %v1604 = vsub.s32 0, %v1602
    %v1605 = vsel %vm1603, %v1604, %v1602
    %v1606 = vclz %v1605
    %v1607 = vsub.s32 %v1606, 2
    %vm1608 = vcmp.gt.s32.totalorder 0, %v1607
    %v1609 = vsel %vm1608, 0, %v1607
    %v1610 = vsub.s32 32, %v1609
    %v1611 = vshll.u32 %v1602, %v1609
    %v1612 = vshrl.u32 %v1594, %v1610
    %v1613 = vor.u32 %v1611, %v1612
    %v1614 = vsub.s32 4294967266, %v1609
    %v1615 = vadd.s32 %v1614, 127
    %v1616 = vshll.u32 %v1615, 23
    %v1617 = vor.u32 4788187, %v1616
    %v1618 = vand.u32 2147483647, %v1617
    %v1620 = vcvt.s32.f32 %v1613
    %v1621 = vmul.f32 %v1620, %v1618
    %v1622 = vxor.u32 %v1621, 2147483648
    %v1623 = vsel %vm1540, %v1622, %v1621
    %v1624 = vsub.s32 4, %v1600
    %v1625 = vsel %vm1540, %v1624, %v1600
    %v1626 = vsel %vm1539, %v46, %v1623
    %v1627 = vsel %vm1539, 0, %v1625
    %v1628 = vcosq.f32.pop %v1626
    %v1629 = vsinq.f32.pop %v1626
    %vm1630 = vweird.f32 %v46
    %v1631 = vand.u32 %v1627, 3
    %vm1632 = vcmp.lt.s32.totalorder %v1631, 2
    %vm1633 = vcmp.eq.s32.totalorder %v1631, 0
    %v1634 = vxor.u32 %v1629, 2147483648
    %v1635 = vsel %vm1633, %v1628, %v1634
    %vm1636 = vcmp.eq.s32.totalorder %v1631, 2
    %v1637 = vxor.u32 %v1628, 2147483648
    %v1638 = vsel %vm1636, %v1637, %v1629
    %v1639 = vsel %vm1632, %v1635, %v1638
    %v1640 = vsel %vm1630, nan, %v1639
    %v1641 = vand.u32 2147483647, %v47
    %vm1642 = vcmp.le.f32.partialorder %v1641, 0.7853982
    %vm1643 = vcmp.lt.s32.totalorder %v47, 0
    %v1644 = vand.u32 %v47, 2139095040
    %v1645 = vshrl.u32 %v1644, 23
    %v1646 = vsub.s32 %v1645, 127
    %v1647 = vand.u32 2147483647, %v47
    %v1648 = vand.u32 %v1647, 8388607
    %v1649 = vor.u32 %v1648, 8388608
    %v1650 = vsub.s32 0, %v1649
    %v1651 = vadd.s32 %v1646, 1
    %vm1652 = vcmp.gt.s32.totalorder %v1651, 0
    %v1653 = vsel %vm1652, %v1651, 0
    %v1654 = vshrl.u32 %v1653, 5
    %v1655 = vand.u32 %v1653, 31
    %v1656 = vsub.s32 32, %v1655
    %v1657 = vshrl.u32 683565275, %v1656
    %v1658 = vshll.u32 683565275, %v1655
    %v1659 = vshrl.u32 2475754826, %v1656
    %v1660 = vor.u32 %v1658, %v1659
    %v1661 = vshll.u32 2475754826, %v1655
    %v1662 = vshrl.u32 2131351028, %v1656
    %v1663 = vor.u32 %v1661, %v1662
    %v1664 = vshll.u32 2131351028, %v1655
    %v1665 = vshrl.u32 2102212464, %v1656
    %v1666 = vor.u32 %v1664, %v1665
    %v1667 = vshll.u32 2102212464, %v1655
    %v1668 = vshrl.u32 920167782, %v1656
    %v1669 = vor.u32 %v1667, %v1668
    %v1670 = vshll.u32 920167782, %v1655
    %v1671 = vshrl.u32 1326507024, %v1656
    %v1672 = vor.u32 %v1670, %v1671
    %vm1673 = vcmp.lt.s32.totalorder %v1654, 1
    %vm1674 = vcmp.lt.s32.totalorder %v1654, 2
    %vm1675 = vcmp.lt.s32.totalorder %v1654, 3
    %vm1676 = vcmp.lt.s32.totalorder %v1654, 4
    %v1677 = vsel %vm1673, %v1657, %v1660
    %v1678 = vsel %vm1676, %v1666, 2102212464
    %v1679 = vsel %vm1675, %v1663, %v1678
    %v1680 = vsel %vm1674, %v1677, %v1679
    %v1681 = vsel %vm1673, %v1660, %v1663
    %v1682 = vsel %vm1676, %v1669, 920167782
    %v1683 = vsel %vm1675, %v1666, %v1682
    %v1684 = vsel %vm1674, %v1681, %v1683
    %v1685 = vsel %vm1673, %v1663, %v1666
    %v1686 = vsel %vm1676, %v1672, 1326507024
    %v1687 = vsel %vm1675, %v1669, %v1686
    %v1688 = vsel %vm1674, %v1685, %v1687
    %v1689 = vshll.u32 %v1649, 8
    %v1690 = vmul.u32.u64.compose %v1689, %v1688
    %v1691 = vextract.low.u32 %v1690
    %v1692 = vextract.high.u32 %v1690
    %v1693 = vmul.u32.u64.compose %v1689, %v1684
    %v1694 = vextract.low.u32 %v1693
    %v1695 = vextract.high.u32 %v1693
    %v1696 = vmul.u32 %v1689, %v1680
    %v1697 = vadd.s32 %v1692, %v1694
    %vm1698 = vc.u32 %v1692, %v1694
    %v1699 = vadd.s32 %v1695, 1
    %v1700 = vsel %vm1698, %v1699, %v1695
    %v1701 = vadd.s32 %v1696, %v1700
    %v1702 = vadd.s32 %v1701, 536870912
    %v1703 = vshrl.u32 %v1702, 30
    %v1704 = vshll.u32 %v1703, 30
    %v1705 = vsub.s32 %v1701, %v1704
    %vm1706 = vcmp.lt.s32.totalorder %v1705, 0
    %v1707 = vsub.s32 0, %v1705
    %v1708 = vsel %vm1706, %v1707, %v1705
    %v1709 = vclz %v1708
    %v1710 = vsub.s32 %v1709, 2
    %vm1711 = vcmp.gt.s32.totalorder 0, %v1710
    %v1712 = vsel %vm1711, 0, %v1710
    %v1713 = vsub.s32 32, %v1712
    %v1714 = vshll.u32 %v1705, %v1712
    %v1715 = vshrl.u32 %v1697, %v1713
    %v1716 = vor.u32 %v1714, %v1715
    %v1717 = vsub.s32 4294967266, %v1712
    %v1718 = vadd.s32 %v1717, 127
    %v1719 = vshll.u32 %v1718, 23
    %v1720 = vor.u32 4788187, %v1719
    %v1721 = vand.u32 2147483647, %v1720
    %v1723 = vcvt.s32.f32 %v1716
    %v1724 = vmul.f32 %v1723, %v1721
    %v1725 = vxor.u32 %v1724, 2147483648
    %v1726 = vsel %vm1643, %v1725, %v1724
    %v1727 = vsub.s32 4, %v1703
    %v1728 = vsel %vm1643, %v1727, %v1703
    %v1729 = vsel %vm1642, %v47, %v1726
    %v1730 = vsel %vm1642, 0, %v1728
    %v1731 = vcosq.f32.pop %v1729
    %v1732 = vsinq.f32.pop %v1729
    %vm1733 = vweird.f32 %v47
    %v1734 = vand.u32 %v1730, 3
    %vm1735 = vcmp.lt.s32.totalorder %v1734, 2
    %vm1736 = vcmp.eq.s32.totalorder %v1734, 0
    %v1737 = vxor.u32 %v1732, 2147483648
    %v1738 = vsel %vm1736, %v1731, %v1737
    %vm1739 = vcmp.eq.s32.totalorder %v1734, 2
    %v1740 = vxor.u32 %v1731, 2147483648
    %v1741 = vsel %vm1739, %v1740, %v1732
    %v1742 = vsel %vm1735, %v1738, %v1741
    %v1743 = vsel %vm1733, nan, %v1742
    %v1744 = vmul.f32 %v905, %v1022
    %v1745 = vmul.f32 %v907, %v1125
    %v1746 = vmul.f32 %v909, %v1228
    %v1747 = vmul.f32 %v911, %v1331
    %v1748 = vmul.f32 %v913, %v1434
    %v1749 = vmul.f32 %v915, %v1537
    %v1750 = vmul.f32 %v917, %v1640
    %v1751 = vmul.f32 %v919, %v1743
    %v1752 = vadd.f32 %v896, %v1744
    %v1753 = vadd.f32 %v897, %v1745
    %v1754 = vadd.f32 %v898, %v1746
    %v1755 = vadd.f32 %v899, %v1747
    %v1756 = vadd.f32 %v900, %v1748
    %v1757 = vadd.f32 %v901, %v1749
    %v1758 = vadd.f32 %v902, %v1750
    %v1759 = vadd.f32 %v903, %v1751
    %v1760 = vmul.f32 %v1752, 10.0
    %v1761 = vmul.f32 %v1753, 10.0
    %v1762 = vmul.f32 %v1754, 10.0
    %v1763 = vmul.f32 %v1755, 10.0
    %v1764 = vmul.f32 %v1756, 10.0
    %v1765 = vmul.f32 %v1757, 10.0
    %v1766 = vmul.f32 %v1758, 10.0
    %v1767 = vmul.f32 %v1759, 10.0
    %1768 = vst [vmem:[#allocation7] sm:$0xff] %v1760
    %1769 = vst [vmem:[#allocation7 + $0x8] sm:$0xff] %v1761
    %1770 = vst [vmem:[#allocation7 + $0x10] sm:$0xff] %v1762
    %1771 = vst [vmem:[#allocation7 + $0x18] sm:$0xff] %v1763
    %1772 = vst [vmem:[#allocation7 + $0x20] sm:$0xff] %v1764
    %1773 = vst [vmem:[#allocation7 + $0x28] sm:$0xff] %v1765
    %1774 = vst [vmem:[#allocation7 + $0x30] sm:$0xff] %v1766
    %1775 = vst [vmem:[#allocation7 + $0x38] sm:$0xff] %v1767
    // Predicated region
    $region18: #{tpu_custom_call.1} parent=1 // pred_check
      _
    $region19: #{tpu_custom_call.1} parent=1 // pred_check_branch
      %1777 = sbr.rel (0) target = $region21
    $region20: #{tpu_custom_call.1} parent=1 // pred_region
      %s1779 = ssub.s32 1024, 256
      %1780 = vsyncadd [#allocation4], %s1779
      %s1781 = sshll.u32 [#allocation7], 4
      %s1782 = int_to_ptr.vmem [resolvable:$true] %s1781
      %1787 = dma.vmem_to_hbm [thread:$0]  %s1782, 256, %s2, [#allocation4], 256, 256, 16
    $region21: #{tpu_custom_call.1} parent=1 // pred_fallthru
      _
    // Predicated region
    $region22: #{tpu_custom_call.1} parent=1 // pred_check
      _
    $region23: #{tpu_custom_call.1} parent=1 // pred_check_branch
      %1789 = sbr.rel (0) target = $region25
    $region24: #{tpu_custom_call.1} parent=1 // pred_region
      %1790 = dma.done [#allocation4], 1024
    $region25: #{tpu_custom_call.1} parent=1 // pred_fallthru
      _
    %1791 = vsyncpa [#allocation3], 1
    %1792 = vsyncpa [#allocation6], 1
    %1793 = vsyncpa [#allocation4], 1

</llo_original>
